<compile_context>
chip_gen: v5e
topology: v5e:2x2
jax: 0.10.0
libtpu: 0.0.40
codegen_flags: <defaults>
</compile_context>

<pallas_src>
import math

import jax
import jax.numpy as jnp
from jax import lax
from jax.experimental import pallas as pl
from jax.experimental.pallas import tpu as pltpu

# ----- model hyper-params (small shapes consistent with the module) -----
D_MODEL = 32            # input_size (d_model)
NHEAD = 4
HEAD_DIM = D_MODEL // NHEAD
NUM_LAYERS = 2
DFF = 4 * D_MODEL       # dim_feedforward = 4 * input_size  (= 128)
OUT_SIZE = 16           # output_size
OUT_PAD = 128           # lane-dense output width (sliced back on host)
SEQ = 8
BATCH = 2
EPS = 1e-5              # PyTorch TransformerEncoderLayer layer_norm_eps default
NEG_INF = -1e30

assert DFF == OUT_PAD   # packing below relies on this


def _layernorm(x, w, b):
    # torch.nn.LayerNorm semantics: biased variance over the last dim (f32).
    mu = jnp.mean(x, axis=-1, keepdims=True)
    var = jnp.mean((x - mu) ** 2, axis=-1, keepdims=True)
    return (x - mu) * lax.rsqrt(var + EPS) * w + b


def transformer_ntm_kernel(
    x_ref,        # (N, D)           f32   N = B*S
    mask_ref,     # (H*N, H*N)       f32   0 / -1e30 block-diag (head, sequence)
    wqkv_ref,     # (L, D, 3D)       bf16  fused QKV, softmax scale folded into Q
    wow2_ref,     # (L, D+DFF, D)    bf16  [Wo ; W2]
    w1fc_ref,     # (L+1, D, DFF)    bf16  [W1 per layer ; fc_w padded to 128]
    vecs_ref,     # (L, 9, D)        f32   [bq, bk, bv, bo, ln1w, ln1b, b2, ln2w, ln2b]
    wideb_ref,    # (L+1, DFF)       f32   [b1 per layer ; fc_b padded to 128]
    out_ref,      # (N, OUT_PAD)     f32
):
    x = x_ref[...]                      # (N, D) f32
    mask = mask_ref[...]                # (H*N, H*N) f32
    wideb = wideb_ref[...]              # (L+1, DFF) f32
    n = x.shape[0]

    for layer in range(NUM_LAYERS):     # static unroll over 2 encoder layers
        wqkv = wqkv_ref[layer]          # (D, 3D) bf16
        wow2 = wow2_ref[layer]          # (D+DFF, D) bf16
        w1 = w1fc_ref[layer]            # (D, DFF) bf16
        vec = vecs_ref[layer]           # (9, D) f32
        wo, w2 = wow2[0:D_MODEL], wow2[D_MODEL:]
        bq, bk, bv = vec[0:1], vec[1:2], vec[2:3]
        bo, ln1w, ln1b = vec[3:4], vec[4:5], vec[5:6]
        b2, ln2w, ln2b = vec[6:7], vec[7:8], vec[8:9]
        b1 = wideb[layer:layer + 1]     # (1, DFF)

        # ---- fused QKV projection: one lane-dense matmul ----
        qkv = jnp.dot(x.astype(jnp.bfloat16), wqkv,
                      preferred_element_type=jnp.float32)            # (N, 3D) f32
        q = qkv[:, 0:D_MODEL] + bq          # softmax scale already folded in
        k = qkv[:, D_MODEL:2 * D_MODEL] + bk
        v = qkv[:, 2 * D_MODEL:3 * D_MODEL] + bv

        def stack_heads(t):                 # (N, D) -> (H*N, Hd): heads along rows
            return jnp.concatenate(
                [t[:, h * HEAD_DIM:(h + 1) * HEAD_DIM] for h in range(NHEAD)],
                axis=0)

        qs = stack_heads(q).astype(jnp.bfloat16)
        ks = stack_heads(k).astype(jnp.bfloat16)
        vs = stack_heads(v).astype(jnp.bfloat16)

        # ---- all heads' scores in ONE matmul; mask keeps softmax within
        #      its own (head, sequence) block ----
        scores = lax.dot_general(qs, ks, (((1,), (1,)), ((), ())),
                                 preferred_element_type=jnp.float32)  # (HN, HN) f32
        scores = scores + mask
        m = jnp.max(scores, axis=-1, keepdims=True)
        p = jnp.exp(scores - m)
        denom = jnp.sum(p, axis=-1, keepdims=True)
        attn = p * pl.reciprocal(denom, approx=True)

        ctx = jnp.dot(attn.astype(jnp.bfloat16), vs,
                      preferred_element_type=jnp.float32)             # (HN, Hd) f32
        # merge heads back onto lanes: (HN, Hd) -> (N, D)
        ctx2 = jnp.concatenate(
            [ctx[h * n:(h + 1) * n, :] for h in range(NHEAD)], axis=1)
        attn_out = jnp.dot(ctx2.astype(jnp.bfloat16), wo,
                           preferred_element_type=jnp.float32) + bo   # (N, D)

        # post-norm residual 1
        x = _layernorm(x + attn_out, ln1w, ln1b)

        # ---- feed-forward (ReLU, PyTorch default), dropout = identity ----
        h1 = jnp.maximum(jnp.dot(x.astype(jnp.bfloat16), w1,
                                 preferred_element_type=jnp.float32) + b1, 0.0)
        ff = jnp.dot(h1.astype(jnp.bfloat16), w2,
                     preferred_element_type=jnp.float32) + b2

        # post-norm residual 2
        x = _layernorm(x + ff, ln2w, ln2b)

    # ---- final fc_out, lane-dense (padded) store ----
    fc_w = w1fc_ref[NUM_LAYERS]                     # (D, OUT_PAD) bf16
    fc_b = wideb[NUM_LAYERS:NUM_LAYERS + 1]         # (1, OUT_PAD) f32
    out_ref[...] = jnp.dot(x.astype(jnp.bfloat16), fc_w,
                           preferred_element_type=jnp.float32) + fc_b


def build_mask(batch, seq):
    """Additive mask over stacked-head rows: token attends only within its own
    (head, sequence) block."""
    n = batch * seq
    hn = NHEAD * n
    idx = jnp.arange(hn)
    head = idx // n
    seq_id = (idx % n) // seq
    same = (head[:, None] == head[None, :]) & (seq_id[:, None] == seq_id[None, :])
    return jnp.where(same, 0.0, NEG_INF).astype(jnp.float32)


def prepare_params(params):
    """Convert PyTorch-convention params (W:(out,in)) to packed kernel layouts."""
    L, D, Hd = NUM_LAYERS, D_MODEL, HEAD_DIM
    scale = 1.0 / math.sqrt(Hd)

    ipw = params["in_proj_w"]                  # (L, 3D, D)
    ipb = params["in_proj_b"]                  # (L, 3D)

    wq = ipw[:, 0:D, :] * scale                # fold softmax scale into Q
    wk = ipw[:, D:2 * D, :]
    wv = ipw[:, 2 * D:3 * D, :]
    wqkv = jnp.concatenate([wq, wk, wv], axis=1).transpose(0, 2, 1)   # (L, D, 3D)

    bq = ipb[:, 0:D] * scale
    bk = ipb[:, D:2 * D]
    bv = ipb[:, 2 * D:3 * D]

    wo = params["out_proj_w"].transpose(0, 2, 1)     # (L, D, D)   (in, out)
    w1 = params["lin1_w"].transpose(0, 2, 1)         # (L, D, DFF)
    w2 = params["lin2_w"].transpose(0, 2, 1)         # (L, DFF, D)

    fc_w = jnp.pad(params["fc_w"].T, ((0, 0), (0, OUT_PAD - OUT_SIZE)))   # (D, 128)
    fc_b = jnp.pad(params["fc_b"], ((0, 0), (0, OUT_PAD - OUT_SIZE)))     # (1, 128)

    # packed slabs: few lane-dense DMAs instead of 19 small padded ones
    wow2 = jnp.concatenate([wo, w2], axis=1).astype(jnp.bfloat16)           # (L, D+DFF, D)
    w1fc = jnp.concatenate([w1, fc_w[None]], axis=0).astype(jnp.bfloat16)   # (L+1, D, 128)
    vecs = jnp.stack([bq, bk, bv,
                      params["out_proj_b"],
                      params["ln1_w"], params["ln1_b"],
                      params["lin2_b"],
                      params["ln2_w"], params["ln2_b"]],
                     axis=1).astype(jnp.float32)                            # (L, 9, D)
    wideb = jnp.concatenate([params["lin1_b"], fc_b],
                            axis=0).astype(jnp.float32)                     # (L+1, 128)

    return dict(wqkv=wqkv.astype(jnp.bfloat16), wow2=wow2, w1fc=w1fc,
                vecs=vecs, wideb=wideb)


def transformer_ntm_forward(x, params):
    B, S, D = x.shape
    kp = prepare_params(params)
    x2 = x.reshape(B * S, D).astype(jnp.float32)   # fold batch into rows; no grid
    mask = build_mask(B, S)

    vmem = pl.BlockSpec(memory_space=pltpu.MemorySpace.VMEM)
    args = (x2, mask, kp["wqkv"], kp["wow2"], kp["w1fc"], kp["vecs"], kp["wideb"])

    out = pl.pallas_call(
        transformer_ntm_kernel,
        out_shape=jax.ShapeDtypeStruct((B * S, OUT_PAD), jnp.float32),
        in_specs=[vmem] * len(args),
        out_specs=vmem,
    )(*args)

    # module returns (out, hidden=None, memory=None)
    return out[:, :OUT_SIZE].reshape(B, S, OUT_SIZE), None, None


def transformer_ntm_reference(x, params):
    """Pure-JAX reference with PyTorch TransformerEncoder (post-norm) semantics."""
    B, S, D = x.shape
    h = x.astype(jnp.float32)

    def ln(v, w, b):
        mu = v.mean(-1, keepdims=True)
        var = ((v - mu) ** 2).mean(-1, keepdims=True)
        return (v - mu) / jnp.sqrt(var + EPS) * w + b

    for l in range(NUM_LAYERS):
        qkv = h @ params["in_proj_w"][l].T + params["in_proj_b"][l]
        q, k, v = jnp.split(qkv, 3, axis=-1)

        def heads(t):
            return t.reshape(B, S, NHEAD, HEAD_DIM).transpose(0, 2, 1, 3)

        qh, kh, vh = heads(q), heads(k), heads(v)
        scores = (qh @ kh.transpose(0, 1, 3, 2)) / math.sqrt(HEAD_DIM)
        attn = jax.nn.softmax(scores, axis=-1)
        ctx = (attn @ vh).transpose(0, 2, 1, 3).reshape(B, S, D)
        attn_out = ctx @ params["out_proj_w"][l].T + params["out_proj_b"][l]
        h = ln(h + attn_out, params["ln1_w"][l], params["ln1_b"][l])

        ff = jnp.maximum(h @ params["lin1_w"][l].T + params["lin1_b"][l], 0.0)
        ff = ff @ params["lin2_w"][l].T + params["lin2_b"][l]
        h = ln(h + ff, params["ln2_w"][l], params["ln2_b"][l])

    return h @ params["fc_w"].T + params["fc_b"]


def init_params(key):
    ks = jax.random.split(key, 8)
    std = 0.02
    L = NUM_LAYERS
    return {
        "in_proj_w":  std * jax.random.normal(ks[0], (L, 3 * D_MODEL, D_MODEL), jnp.float32),
        "in_proj_b":  jnp.zeros((L, 3 * D_MODEL), jnp.float32),
        "out_proj_w": std * jax.random.normal(ks[1], (L, D_MODEL, D_MODEL), jnp.float32),
        "out_proj_b": jnp.zeros((L, D_MODEL), jnp.float32),
        "ln1_w": jnp.ones((L, D_MODEL), jnp.float32),
        "ln1_b": jnp.zeros((L, D_MODEL), jnp.float32),
        "lin1_w": std * jax.random.normal(ks[2], (L, DFF, D_MODEL), jnp.float32),
        "lin1_b": jnp.zeros((L, DFF), jnp.float32),
        "lin2_w": std * jax.random.normal(ks[3], (L, D_MODEL, DFF), jnp.float32),
        "lin2_b": jnp.zeros((L, D_MODEL), jnp.float32),
        "ln2_w": jnp.ones((L, D_MODEL), jnp.float32),
        "ln2_b": jnp.zeros((L, D_MODEL), jnp.float32),
        "fc_w": std * jax.random.normal(ks[4], (OUT_SIZE, D_MODEL), jnp.float32),
        "fc_b": jnp.zeros((1, OUT_SIZE), jnp.float32),
    }


if __name__ == "__main__":
    key = jax.random.PRNGKey(0)
    pkey, xkey = jax.random.split(key)
    params = init_params(pkey)
    x_emb = jax.random.normal(xkey, (BATCH, SEQ, D_MODEL), jnp.float32)

    out, hidden, memory = transformer_ntm_forward(x_emb, params)
    out = jax.block_until_ready(out)

    assert out.shape == (BATCH, SEQ, OUT_SIZE)
    assert hidden is None and memory is None
    assert bool(jnp.all(jnp.isfinite(out)))

    # correctness vs pure-JAX PyTorch-semantics reference (bf16 MXU operands +
    # approx-reciprocal softmax introduce ~1e-3 error, within tolerance).
    ref = transformer_ntm_reference(x_emb, params)
    max_err = float(jnp.max(jnp.abs(out - ref)))
    assert max_err < 1e-2, f"mismatch vs reference: {max_err}"

    print("KERNEL_OK")
</pallas_src>

<mosaic_0001>
module attributes {stable_mosaic.version = 11 : i64} {
  func.func @transformer_ntm_kernel(%arg0: memref<16x32xf32, #tpu.memory_space<vmem>>, %arg1: memref<64x64xf32, #tpu.memory_space<vmem>>, %arg2: memref<2x32x96xbf16, #tpu.memory_space<vmem>>, %arg3: memref<2x160x32xbf16, #tpu.memory_space<vmem>>, %arg4: memref<3x32x128xbf16, #tpu.memory_space<vmem>>, %arg5: memref<2x9x32xf32, #tpu.memory_space<vmem>>, %arg6: memref<3x128xf32, #tpu.memory_space<vmem>>, %arg7: memref<16x128xf32, #tpu.memory_space<vmem>>) attributes {dimension_semantics = [], scalar_prefetch = 0 : i64, scratch_operands = 0 : i64, tpu.core_type = #tpu.core_type<tc>} {
    %c0 = arith.constant 0 : index
    %c0_0 = arith.constant 0 : index
    %0 = vector.load %arg0[%c0, %c0_0] : memref<16x32xf32, #tpu.memory_space<vmem>>, vector<16x32xf32>
    %c0_1 = arith.constant 0 : index
    %c0_2 = arith.constant 0 : index
    %1 = vector.load %arg1[%c0_1, %c0_2] : memref<64x64xf32, #tpu.memory_space<vmem>>, vector<64x64xf32>
    %c0_3 = arith.constant 0 : index
    %c0_4 = arith.constant 0 : index
    %2 = vector.load %arg6[%c0_3, %c0_4] : memref<3x128xf32, #tpu.memory_space<vmem>>, vector<3x128xf32>
    %c0_5 = arith.constant 0 : index
    %c0_6 = arith.constant 0 : index
    %c0_7 = arith.constant 0 : index
    %3 = vector.load %arg2[%c0_5, %c0_6, %c0_7] : memref<2x32x96xbf16, #tpu.memory_space<vmem>>, vector<1x32x96xbf16>
    %4 = vector.shape_cast %3 : vector<1x32x96xbf16> to vector<32x96xbf16>
    %c0_8 = arith.constant 0 : index
    %c0_9 = arith.constant 0 : index
    %c0_10 = arith.constant 0 : index
    %5 = vector.load %arg3[%c0_8, %c0_9, %c0_10] : memref<2x160x32xbf16, #tpu.memory_space<vmem>>, vector<1x160x32xbf16>
    %6 = vector.shape_cast %5 : vector<1x160x32xbf16> to vector<160x32xbf16>
    %c0_11 = arith.constant 0 : index
    %c0_12 = arith.constant 0 : index
    %c0_13 = arith.constant 0 : index
    %7 = vector.load %arg4[%c0_11, %c0_12, %c0_13] : memref<3x32x128xbf16, #tpu.memory_space<vmem>>, vector<1x32x128xbf16>
    %8 = vector.shape_cast %7 : vector<1x32x128xbf16> to vector<32x128xbf16>
    %c0_14 = arith.constant 0 : index
    %c0_15 = arith.constant 0 : index
    %c0_16 = arith.constant 0 : index
    %9 = vector.load %arg5[%c0_14, %c0_15, %c0_16] : memref<2x9x32xf32, #tpu.memory_space<vmem>>, vector<1x9x32xf32>
    %10 = vector.shape_cast %9 : vector<1x9x32xf32> to vector<9x32xf32>
    %11 = vector.extract_strided_slice %6 {offsets = [0, 0], sizes = [32, 32], strides = [1, 1]} : vector<160x32xbf16> to vector<32x32xbf16>
    %12 = vector.extract_strided_slice %6 {offsets = [32, 0], sizes = [128, 32], strides = [1, 1]} : vector<160x32xbf16> to vector<128x32xbf16>
    %13 = vector.extract_strided_slice %10 {offsets = [0, 0], sizes = [1, 32], strides = [1, 1]} : vector<9x32xf32> to vector<1x32xf32>
    %14 = vector.extract_strided_slice %10 {offsets = [1, 0], sizes = [1, 32], strides = [1, 1]} : vector<9x32xf32> to vector<1x32xf32>
    %15 = vector.extract_strided_slice %10 {offsets = [2, 0], sizes = [1, 32], strides = [1, 1]} : vector<9x32xf32> to vector<1x32xf32>
    %16 = vector.extract_strided_slice %10 {offsets = [3, 0], sizes = [1, 32], strides = [1, 1]} : vector<9x32xf32> to vector<1x32xf32>
    %17 = vector.extract_strided_slice %10 {offsets = [4, 0], sizes = [1, 32], strides = [1, 1]} : vector<9x32xf32> to vector<1x32xf32>
    %18 = vector.extract_strided_slice %10 {offsets = [5, 0], sizes = [1, 32], strides = [1, 1]} : vector<9x32xf32> to vector<1x32xf32>
    %19 = vector.extract_strided_slice %10 {offsets = [6, 0], sizes = [1, 32], strides = [1, 1]} : vector<9x32xf32> to vector<1x32xf32>
    %20 = vector.extract_strided_slice %10 {offsets = [7, 0], sizes = [1, 32], strides = [1, 1]} : vector<9x32xf32> to vector<1x32xf32>
    %21 = vector.extract_strided_slice %10 {offsets = [8, 0], sizes = [1, 32], strides = [1, 1]} : vector<9x32xf32> to vector<1x32xf32>
    %22 = vector.extract_strided_slice %2 {offsets = [0, 0], sizes = [1, 128], strides = [1, 1]} : vector<3x128xf32> to vector<1x128xf32>
    %23 = arith.truncf %0 : vector<16x32xf32> to vector<16x32xbf16>
    %cst = arith.constant dense<0.000000e+00> : vector<16x96xf32>
    %24 = tpu.matmul %23, %4, %cst {dimension_numbers = #tpu.dot_dimension_numbers<[1], [0], [0], [1], [0, 0, 1, 1], [], []>} : vector<16x32xbf16>, vector<32x96xbf16>, vector<16x96xf32> -> vector<16x96xf32>
    %25 = vector.extract_strided_slice %24 {offsets = [0, 0], sizes = [16, 32], strides = [1, 1]} : vector<16x96xf32> to vector<16x32xf32>
    %26 = vector.broadcast %13 : vector<1x32xf32> to vector<16x32xf32>
    %27 = arith.addf %25, %26 : vector<16x32xf32>
    %28 = vector.extract_strided_slice %24 {offsets = [0, 32], sizes = [16, 32], strides = [1, 1]} : vector<16x96xf32> to vector<16x32xf32>
    %29 = vector.broadcast %14 : vector<1x32xf32> to vector<16x32xf32>
    %30 = arith.addf %28, %29 : vector<16x32xf32>
    %31 = vector.extract_strided_slice %24 {offsets = [0, 64], sizes = [16, 32], strides = [1, 1]} : vector<16x96xf32> to vector<16x32xf32>
    %32 = vector.broadcast %15 : vector<1x32xf32> to vector<16x32xf32>
    %33 = arith.addf %31, %32 : vector<16x32xf32>
    %34 = vector.extract_strided_slice %27 {offsets = [0, 0], sizes = [16, 8], strides = [1, 1]} : vector<16x32xf32> to vector<16x8xf32>
    %35 = vector.extract_strided_slice %27 {offsets = [0, 8], sizes = [16, 8], strides = [1, 1]} : vector<16x32xf32> to vector<16x8xf32>
    %36 = vector.extract_strided_slice %27 {offsets = [0, 16], sizes = [16, 8], strides = [1, 1]} : vector<16x32xf32> to vector<16x8xf32>
    %37 = vector.extract_strided_slice %27 {offsets = [0, 24], sizes = [16, 8], strides = [1, 1]} : vector<16x32xf32> to vector<16x8xf32>
    %38 = tpu.concatenate %34, %35, %36, %37 in 0 : vector<16x8xf32>, vector<16x8xf32>, vector<16x8xf32>, vector<16x8xf32> -> vector<64x8xf32>
    %39 = arith.truncf %38 : vector<64x8xf32> to vector<64x8xbf16>
    %40 = vector.extract_strided_slice %30 {offsets = [0, 0], sizes = [16, 8], strides = [1, 1]} : vector<16x32xf32> to vector<16x8xf32>
    %41 = vector.extract_strided_slice %30 {offsets = [0, 8], sizes = [16, 8], strides = [1, 1]} : vector<16x32xf32> to vector<16x8xf32>
    %42 = vector.extract_strided_slice %30 {offsets = [0, 16], sizes = [16, 8], strides = [1, 1]} : vector<16x32xf32> to vector<16x8xf32>
    %43 = vector.extract_strided_slice %30 {offsets = [0, 24], sizes = [16, 8], strides = [1, 1]} : vector<16x32xf32> to vector<16x8xf32>
    %44 = tpu.concatenate %40, %41, %42, %43 in 0 : vector<16x8xf32>, vector<16x8xf32>, vector<16x8xf32>, vector<16x8xf32> -> vector<64x8xf32>
    %45 = arith.truncf %44 : vector<64x8xf32> to vector<64x8xbf16>
    %46 = vector.extract_strided_slice %33 {offsets = [0, 0], sizes = [16, 8], strides = [1, 1]} : vector<16x32xf32> to vector<16x8xf32>
    %47 = vector.extract_strided_slice %33 {offsets = [0, 8], sizes = [16, 8], strides = [1, 1]} : vector<16x32xf32> to vector<16x8xf32>
    %48 = vector.extract_strided_slice %33 {offsets = [0, 16], sizes = [16, 8], strides = [1, 1]} : vector<16x32xf32> to vector<16x8xf32>
    %49 = vector.extract_strided_slice %33 {offsets = [0, 24], sizes = [16, 8], strides = [1, 1]} : vector<16x32xf32> to vector<16x8xf32>
    %50 = tpu.concatenate %46, %47, %48, %49 in 0 : vector<16x8xf32>, vector<16x8xf32>, vector<16x8xf32>, vector<16x8xf32> -> vector<64x8xf32>
    %51 = arith.truncf %50 : vector<64x8xf32> to vector<64x8xbf16>
    %cst_17 = arith.constant dense<0.000000e+00> : vector<64x64xf32>
    %52 = tpu.matmul %39, %45, %cst_17 {dimension_numbers = #tpu.dot_dimension_numbers<[1], [1], [0], [0], [0, 0, 1, 0], [], []>} : vector<64x8xbf16>, vector<64x8xbf16>, vector<64x64xf32> -> vector<64x64xf32>
    %53 = arith.addf %52, %1 : vector<64x64xf32>
    %cst_18 = arith.constant dense<0xFF800000> : vector<64xf32>
    %54 = vector.multi_reduction <maximumf>, %53, %cst_18 [1] : vector<64x64xf32> to vector<64xf32>
    %55 = vector.shape_cast %54 : vector<64xf32> to vector<64x1xf32>
    %56 = vector.broadcast %55 : vector<64x1xf32> to vector<64x64xf32>
    %57 = arith.subf %53, %56 : vector<64x64xf32>
    %58 = math.exp %57 : vector<64x64xf32>
    %cst_19 = arith.constant dense<0.000000e+00> : vector<64xf32>
    %59 = vector.multi_reduction <add>, %58, %cst_19 [1] : vector<64x64xf32> to vector<64xf32>
    %60 = vector.shape_cast %59 : vector<64xf32> to vector<64x1xf32>
    %61 = tpu.reciprocal %60 {approx = true} : vector<64x1xf32> -> vector<64x1xf32>
    %62 = vector.broadcast %61 : vector<64x1xf32> to vector<64x64xf32>
    %63 = arith.mulf %58, %62 : vector<64x64xf32>
    %64 = arith.truncf %63 : vector<64x64xf32> to vector<64x64xbf16>
    %cst_20 = arith.constant dense<0.000000e+00> : vector<64x8xf32>
    %65 = tpu.matmul %64, %51, %cst_20 {dimension_numbers = #tpu.dot_dimension_numbers<[1], [0], [0], [1], [0, 0, 1, 1], [], []>} : vector<64x64xbf16>, vector<64x8xbf16>, vector<64x8xf32> -> vector<64x8xf32>
    %66 = vector.extract_strided_slice %65 {offsets = [0, 0], sizes = [16, 8], strides = [1, 1]} : vector<64x8xf32> to vector<16x8xf32>
    %67 = vector.extract_strided_slice %65 {offsets = [16, 0], sizes = [16, 8], strides = [1, 1]} : vector<64x8xf32> to vector<16x8xf32>
    %68 = vector.extract_strided_slice %65 {offsets = [32, 0], sizes = [16, 8], strides = [1, 1]} : vector<64x8xf32> to vector<16x8xf32>
    %69 = vector.extract_strided_slice %65 {offsets = [48, 0], sizes = [16, 8], strides = [1, 1]} : vector<64x8xf32> to vector<16x8xf32>
    %70 = tpu.concatenate %66, %67, %68, %69 in 1 : vector<16x8xf32>, vector<16x8xf32>, vector<16x8xf32>, vector<16x8xf32> -> vector<16x32xf32>
    %71 = arith.truncf %70 : vector<16x32xf32> to vector<16x32xbf16>
    %cst_21 = arith.constant dense<0.000000e+00> : vector<16x32xf32>
    %72 = tpu.matmul %71, %11, %cst_21 {dimension_numbers = #tpu.dot_dimension_numbers<[1], [0], [0], [1], [0, 0, 1, 1], [], []>} : vector<16x32xbf16>, vector<32x32xbf16>, vector<16x32xf32> -> vector<16x32xf32>
    %73 = vector.broadcast %16 : vector<1x32xf32> to vector<16x32xf32>
    %74 = arith.addf %72, %73 : vector<16x32xf32>
    %75 = arith.addf %0, %74 : vector<16x32xf32>
    %cst_22 = arith.constant dense<0.000000e+00> : vector<16xf32>
    %76 = vector.multi_reduction <add>, %75, %cst_22 [1] : vector<16x32xf32> to vector<16xf32>
    %77 = vector.shape_cast %76 : vector<16xf32> to vector<16x1xf32>
    %cst_23 = arith.constant 3.200000e+01 : f32
    %78 = vector.broadcast %cst_23 : f32 to vector<16x1xf32>
    %79 = arith.divf %77, %78 : vector<16x1xf32>
    %80 = vector.broadcast %79 : vector<16x1xf32> to vector<16x32xf32>
    %81 = arith.subf %75, %80 : vector<16x32xf32>
    %82 = arith.mulf %81, %81 : vector<16x32xf32>
    %cst_24 = arith.constant dense<0.000000e+00> : vector<16xf32>
    %83 = vector.multi_reduction <add>, %82, %cst_24 [1] : vector<16x32xf32> to vector<16xf32>
    %84 = vector.shape_cast %83 : vector<16xf32> to vector<16x1xf32>
    %cst_25 = arith.constant 3.200000e+01 : f32
    %85 = vector.broadcast %cst_25 : f32 to vector<16x1xf32>
    %86 = arith.divf %84, %85 : vector<16x1xf32>
    %87 = vector.broadcast %79 : vector<16x1xf32> to vector<16x32xf32>
    %88 = arith.subf %75, %87 : vector<16x32xf32>
    %cst_26 = arith.constant 9.99999974E-6 : f32
    %89 = vector.broadcast %cst_26 : f32 to vector<16x1xf32>
    %90 = arith.addf %86, %89 : vector<16x1xf32>
    %91 = math.rsqrt %90 : vector<16x1xf32>
    %92 = vector.broadcast %91 : vector<16x1xf32> to vector<16x32xf32>
    %93 = arith.mulf %88, %92 : vector<16x32xf32>
    %94 = vector.broadcast %17 : vector<1x32xf32> to vector<16x32xf32>
    %95 = arith.mulf %93, %94 : vector<16x32xf32>
    %96 = vector.broadcast %18 : vector<1x32xf32> to vector<16x32xf32>
    %97 = arith.addf %95, %96 : vector<16x32xf32>
    %98 = arith.truncf %97 : vector<16x32xf32> to vector<16x32xbf16>
    %cst_27 = arith.constant dense<0.000000e+00> : vector<16x128xf32>
    %99 = tpu.matmul %98, %8, %cst_27 {dimension_numbers = #tpu.dot_dimension_numbers<[1], [0], [0], [1], [0, 0, 1, 1], [], []>} : vector<16x32xbf16>, vector<32x128xbf16>, vector<16x128xf32> -> vector<16x128xf32>
    %100 = vector.broadcast %22 : vector<1x128xf32> to vector<16x128xf32>
    %101 = arith.addf %99, %100 : vector<16x128xf32>
    %cst_28 = arith.constant 0.000000e+00 : f32
    %102 = vector.broadcast %cst_28 : f32 to vector<16x128xf32>
    %103 = arith.maximumf %101, %102 : vector<16x128xf32>
    %104 = arith.truncf %103 : vector<16x128xf32> to vector<16x128xbf16>
    %cst_29 = arith.constant dense<0.000000e+00> : vector<16x32xf32>
    %105 = tpu.matmul %104, %12, %cst_29 {dimension_numbers = #tpu.dot_dimension_numbers<[1], [0], [0], [1], [0, 0, 1, 1], [], []>} : vector<16x128xbf16>, vector<128x32xbf16>, vector<16x32xf32> -> vector<16x32xf32>
    %106 = vector.broadcast %19 : vector<1x32xf32> to vector<16x32xf32>
    %107 = arith.addf %105, %106 : vector<16x32xf32>
    %108 = arith.addf %97, %107 : vector<16x32xf32>
    %cst_30 = arith.constant dense<0.000000e+00> : vector<16xf32>
    %109 = vector.multi_reduction <add>, %108, %cst_30 [1] : vector<16x32xf32> to vector<16xf32>
    %110 = vector.shape_cast %109 : vector<16xf32> to vector<16x1xf32>
    %cst_31 = arith.constant 3.200000e+01 : f32
    %111 = vector.broadcast %cst_31 : f32 to vector<16x1xf32>
    %112 = arith.divf %110, %111 : vector<16x1xf32>
    %113 = vector.broadcast %112 : vector<16x1xf32> to vector<16x32xf32>
    %114 = arith.subf %108, %113 : vector<16x32xf32>
    %115 = arith.mulf %114, %114 : vector<16x32xf32>
    %cst_32 = arith.constant dense<0.000000e+00> : vector<16xf32>
    %116 = vector.multi_reduction <add>, %115, %cst_32 [1] : vector<16x32xf32> to vector<16xf32>
    %117 = vector.shape_cast %116 : vector<16xf32> to vector<16x1xf32>
    %cst_33 = arith.constant 3.200000e+01 : f32
    %118 = vector.broadcast %cst_33 : f32 to vector<16x1xf32>
    %119 = arith.divf %117, %118 : vector<16x1xf32>
    %120 = vector.broadcast %112 : vector<16x1xf32> to vector<16x32xf32>
    %121 = arith.subf %108, %120 : vector<16x32xf32>
    %cst_34 = arith.constant 9.99999974E-6 : f32
    %122 = vector.broadcast %cst_34 : f32 to vector<16x1xf32>
    %123 = arith.addf %119, %122 : vector<16x1xf32>
    %124 = math.rsqrt %123 : vector<16x1xf32>
    %125 = vector.broadcast %124 : vector<16x1xf32> to vector<16x32xf32>
    %126 = arith.mulf %121, %125 : vector<16x32xf32>
    %127 = vector.broadcast %20 : vector<1x32xf32> to vector<16x32xf32>
    %128 = arith.mulf %126, %127 : vector<16x32xf32>
    %129 = vector.broadcast %21 : vector<1x32xf32> to vector<16x32xf32>
    %130 = arith.addf %128, %129 : vector<16x32xf32>
    %c1 = arith.constant 1 : index
    %c0_35 = arith.constant 0 : index
    %c0_36 = arith.constant 0 : index
    %131 = vector.load %arg2[%c1, %c0_35, %c0_36] : memref<2x32x96xbf16, #tpu.memory_space<vmem>>, vector<1x32x96xbf16>
    %132 = vector.shape_cast %131 : vector<1x32x96xbf16> to vector<32x96xbf16>
    %c1_37 = arith.constant 1 : index
    %c0_38 = arith.constant 0 : index
    %c0_39 = arith.constant 0 : index
    %133 = vector.load %arg3[%c1_37, %c0_38, %c0_39] : memref<2x160x32xbf16, #tpu.memory_space<vmem>>, vector<1x160x32xbf16>
    %134 = vector.shape_cast %133 : vector<1x160x32xbf16> to vector<160x32xbf16>
    %c1_40 = arith.constant 1 : index
    %c0_41 = arith.constant 0 : index
    %c0_42 = arith.constant 0 : index
    %135 = vector.load %arg4[%c1_40, %c0_41, %c0_42] : memref<3x32x128xbf16, #tpu.memory_space<vmem>>, vector<1x32x128xbf16>
    %136 = vector.shape_cast %135 : vector<1x32x128xbf16> to vector<32x128xbf16>
    %c1_43 = arith.constant 1 : index
    %c0_44 = arith.constant 0 : index
    %c0_45 = arith.constant 0 : index
    %137 = vector.load %arg5[%c1_43, %c0_44, %c0_45] : memref<2x9x32xf32, #tpu.memory_space<vmem>>, vector<1x9x32xf32>
    %138 = vector.shape_cast %137 : vector<1x9x32xf32> to vector<9x32xf32>
    %139 = vector.extract_strided_slice %134 {offsets = [0, 0], sizes = [32, 32], strides = [1, 1]} : vector<160x32xbf16> to vector<32x32xbf16>
    %140 = vector.extract_strided_slice %134 {offsets = [32, 0], sizes = [128, 32], strides = [1, 1]} : vector<160x32xbf16> to vector<128x32xbf16>
    %141 = vector.extract_strided_slice %138 {offsets = [0, 0], sizes = [1, 32], strides = [1, 1]} : vector<9x32xf32> to vector<1x32xf32>
    %142 = vector.extract_strided_slice %138 {offsets = [1, 0], sizes = [1, 32], strides = [1, 1]} : vector<9x32xf32> to vector<1x32xf32>
    %143 = vector.extract_strided_slice %138 {offsets = [2, 0], sizes = [1, 32], strides = [1, 1]} : vector<9x32xf32> to vector<1x32xf32>
    %144 = vector.extract_strided_slice %138 {offsets = [3, 0], sizes = [1, 32], strides = [1, 1]} : vector<9x32xf32> to vector<1x32xf32>
    %145 = vector.extract_strided_slice %138 {offsets = [4, 0], sizes = [1, 32], strides = [1, 1]} : vector<9x32xf32> to vector<1x32xf32>
    %146 = vector.extract_strided_slice %138 {offsets = [5, 0], sizes = [1, 32], strides = [1, 1]} : vector<9x32xf32> to vector<1x32xf32>
    %147 = vector.extract_strided_slice %138 {offsets = [6, 0], sizes = [1, 32], strides = [1, 1]} : vector<9x32xf32> to vector<1x32xf32>
    %148 = vector.extract_strided_slice %138 {offsets = [7, 0], sizes = [1, 32], strides = [1, 1]} : vector<9x32xf32> to vector<1x32xf32>
    %149 = vector.extract_strided_slice %138 {offsets = [8, 0], sizes = [1, 32], strides = [1, 1]} : vector<9x32xf32> to vector<1x32xf32>
    %150 = vector.extract_strided_slice %2 {offsets = [1, 0], sizes = [1, 128], strides = [1, 1]} : vector<3x128xf32> to vector<1x128xf32>
    %151 = arith.truncf %130 : vector<16x32xf32> to vector<16x32xbf16>
    %cst_46 = arith.constant dense<0.000000e+00> : vector<16x96xf32>
    %152 = tpu.matmul %151, %132, %cst_46 {dimension_numbers = #tpu.dot_dimension_numbers<[1], [0], [0], [1], [0, 0, 1, 1], [], []>} : vector<16x32xbf16>, vector<32x96xbf16>, vector<16x96xf32> -> vector<16x96xf32>
    %153 = vector.extract_strided_slice %152 {offsets = [0, 0], sizes = [16, 32], strides = [1, 1]} : vector<16x96xf32> to vector<16x32xf32>
    %154 = vector.broadcast %141 : vector<1x32xf32> to vector<16x32xf32>
    %155 = arith.addf %153, %154 : vector<16x32xf32>
    %156 = vector.extract_strided_slice %152 {offsets = [0, 32], sizes = [16, 32], strides = [1, 1]} : vector<16x96xf32> to vector<16x32xf32>
    %157 = vector.broadcast %142 : vector<1x32xf32> to vector<16x32xf32>
    %158 = arith.addf %156, %157 : vector<16x32xf32>
    %159 = vector.extract_strided_slice %152 {offsets = [0, 64], sizes = [16, 32], strides = [1, 1]} : vector<16x96xf32> to vector<16x32xf32>
    %160 = vector.broadcast %143 : vector<1x32xf32> to vector<16x32xf32>
    %161 = arith.addf %159, %160 : vector<16x32xf32>
    %162 = vector.extract_strided_slice %155 {offsets = [0, 0], sizes = [16, 8], strides = [1, 1]} : vector<16x32xf32> to vector<16x8xf32>
    %163 = vector.extract_strided_slice %155 {offsets = [0, 8], sizes = [16, 8], strides = [1, 1]} : vector<16x32xf32> to vector<16x8xf32>
    %164 = vector.extract_strided_slice %155 {offsets = [0, 16], sizes = [16, 8], strides = [1, 1]} : vector<16x32xf32> to vector<16x8xf32>
    %165 = vector.extract_strided_slice %155 {offsets = [0, 24], sizes = [16, 8], strides = [1, 1]} : vector<16x32xf32> to vector<16x8xf32>
    %166 = tpu.concatenate %162, %163, %164, %165 in 0 : vector<16x8xf32>, vector<16x8xf32>, vector<16x8xf32>, vector<16x8xf32> -> vector<64x8xf32>
    %167 = arith.truncf %166 : vector<64x8xf32> to vector<64x8xbf16>
    %168 = vector.extract_strided_slice %158 {offsets = [0, 0], sizes = [16, 8], strides = [1, 1]} : vector<16x32xf32> to vector<16x8xf32>
    %169 = vector.extract_strided_slice %158 {offsets = [0, 8], sizes = [16, 8], strides = [1, 1]} : vector<16x32xf32> to vector<16x8xf32>
    %170 = vector.extract_strided_slice %158 {offsets = [0, 16], sizes = [16, 8], strides = [1, 1]} : vector<16x32xf32> to vector<16x8xf32>
    %171 = vector.extract_strided_slice %158 {offsets = [0, 24], sizes = [16, 8], strides = [1, 1]} : vector<16x32xf32> to vector<16x8xf32>
    %172 = tpu.concatenate %168, %169, %170, %171 in 0 : vector<16x8xf32>, vector<16x8xf32>, vector<16x8xf32>, vector<16x8xf32> -> vector<64x8xf32>
    %173 = arith.truncf %172 : vector<64x8xf32> to vector<64x8xbf16>
    %174 = vector.extract_strided_slice %161 {offsets = [0, 0], sizes = [16, 8], strides = [1, 1]} : vector<16x32xf32> to vector<16x8xf32>
    %175 = vector.extract_strided_slice %161 {offsets = [0, 8], sizes = [16, 8], strides = [1, 1]} : vector<16x32xf32> to vector<16x8xf32>
    %176 = vector.extract_strided_slice %161 {offsets = [0, 16], sizes = [16, 8], strides = [1, 1]} : vector<16x32xf32> to vector<16x8xf32>
    %177 = vector.extract_strided_slice %161 {offsets = [0, 24], sizes = [16, 8], strides = [1, 1]} : vector<16x32xf32> to vector<16x8xf32>
    %178 = tpu.concatenate %174, %175, %176, %177 in 0 : vector<16x8xf32>, vector<16x8xf32>, vector<16x8xf32>, vector<16x8xf32> -> vector<64x8xf32>
    %179 = arith.truncf %178 : vector<64x8xf32> to vector<64x8xbf16>
    %cst_47 = arith.constant dense<0.000000e+00> : vector<64x64xf32>
    %180 = tpu.matmul %167, %173, %cst_47 {dimension_numbers = #tpu.dot_dimension_numbers<[1], [1], [0], [0], [0, 0, 1, 0], [], []>} : vector<64x8xbf16>, vector<64x8xbf16>, vector<64x64xf32> -> vector<64x64xf32>
    %181 = arith.addf %180, %1 : vector<64x64xf32>
    %cst_48 = arith.constant dense<0xFF800000> : vector<64xf32>
    %182 = vector.multi_reduction <maximumf>, %181, %cst_48 [1] : vector<64x64xf32> to vector<64xf32>
    %183 = vector.shape_cast %182 : vector<64xf32> to vector<64x1xf32>
    %184 = vector.broadcast %183 : vector<64x1xf32> to vector<64x64xf32>
    %185 = arith.subf %181, %184 : vector<64x64xf32>
    %186 = math.exp %185 : vector<64x64xf32>
    %cst_49 = arith.constant dense<0.000000e+00> : vector<64xf32>
    %187 = vector.multi_reduction <add>, %186, %cst_49 [1] : vector<64x64xf32> to vector<64xf32>
    %188 = vector.shape_cast %187 : vector<64xf32> to vector<64x1xf32>
    %189 = tpu.reciprocal %188 {approx = true} : vector<64x1xf32> -> vector<64x1xf32>
    %190 = vector.broadcast %189 : vector<64x1xf32> to vector<64x64xf32>
    %191 = arith.mulf %186, %190 : vector<64x64xf32>
    %192 = arith.truncf %191 : vector<64x64xf32> to vector<64x64xbf16>
    %cst_50 = arith.constant dense<0.000000e+00> : vector<64x8xf32>
    %193 = tpu.matmul %192, %179, %cst_50 {dimension_numbers = #tpu.dot_dimension_numbers<[1], [0], [0], [1], [0, 0, 1, 1], [], []>} : vector<64x64xbf16>, vector<64x8xbf16>, vector<64x8xf32> -> vector<64x8xf32>
    %194 = vector.extract_strided_slice %193 {offsets = [0, 0], sizes = [16, 8], strides = [1, 1]} : vector<64x8xf32> to vector<16x8xf32>
    %195 = vector.extract_strided_slice %193 {offsets = [16, 0], sizes = [16, 8], strides = [1, 1]} : vector<64x8xf32> to vector<16x8xf32>
    %196 = vector.extract_strided_slice %193 {offsets = [32, 0], sizes = [16, 8], strides = [1, 1]} : vector<64x8xf32> to vector<16x8xf32>
    %197 = vector.extract_strided_slice %193 {offsets = [48, 0], sizes = [16, 8], strides = [1, 1]} : vector<64x8xf32> to vector<16x8xf32>
    %198 = tpu.concatenate %194, %195, %196, %197 in 1 : vector<16x8xf32>, vector<16x8xf32>, vector<16x8xf32>, vector<16x8xf32> -> vector<16x32xf32>
    %199 = arith.truncf %198 : vector<16x32xf32> to vector<16x32xbf16>
    %cst_51 = arith.constant dense<0.000000e+00> : vector<16x32xf32>
    %200 = tpu.matmul %199, %139, %cst_51 {dimension_numbers = #tpu.dot_dimension_numbers<[1], [0], [0], [1], [0, 0, 1, 1], [], []>} : vector<16x32xbf16>, vector<32x32xbf16>, vector<16x32xf32> -> vector<16x32xf32>
    %201 = vector.broadcast %144 : vector<1x32xf32> to vector<16x32xf32>
    %202 = arith.addf %200, %201 : vector<16x32xf32>
    %203 = arith.addf %130, %202 : vector<16x32xf32>
    %cst_52 = arith.constant dense<0.000000e+00> : vector<16xf32>
    %204 = vector.multi_reduction <add>, %203, %cst_52 [1] : vector<16x32xf32> to vector<16xf32>
    %205 = vector.shape_cast %204 : vector<16xf32> to vector<16x1xf32>
    %cst_53 = arith.constant 3.200000e+01 : f32
    %206 = vector.broadcast %cst_53 : f32 to vector<16x1xf32>
    %207 = arith.divf %205, %206 : vector<16x1xf32>
    %208 = vector.broadcast %207 : vector<16x1xf32> to vector<16x32xf32>
    %209 = arith.subf %203, %208 : vector<16x32xf32>
    %210 = arith.mulf %209, %209 : vector<16x32xf32>
    %cst_54 = arith.constant dense<0.000000e+00> : vector<16xf32>
    %211 = vector.multi_reduction <add>, %210, %cst_54 [1] : vector<16x32xf32> to vector<16xf32>
    %212 = vector.shape_cast %211 : vector<16xf32> to vector<16x1xf32>
    %cst_55 = arith.constant 3.200000e+01 : f32
    %213 = vector.broadcast %cst_55 : f32 to vector<16x1xf32>
    %214 = arith.divf %212, %213 : vector<16x1xf32>
    %215 = vector.broadcast %207 : vector<16x1xf32> to vector<16x32xf32>
    %216 = arith.subf %203, %215 : vector<16x32xf32>
    %cst_56 = arith.constant 9.99999974E-6 : f32
    %217 = vector.broadcast %cst_56 : f32 to vector<16x1xf32>
    %218 = arith.addf %214, %217 : vector<16x1xf32>
    %219 = math.rsqrt %218 : vector<16x1xf32>
    %220 = vector.broadcast %219 : vector<16x1xf32> to vector<16x32xf32>
    %221 = arith.mulf %216, %220 : vector<16x32xf32>
    %222 = vector.broadcast %145 : vector<1x32xf32> to vector<16x32xf32>
    %223 = arith.mulf %221, %222 : vector<16x32xf32>
    %224 = vector.broadcast %146 : vector<1x32xf32> to vector<16x32xf32>
    %225 = arith.addf %223, %224 : vector<16x32xf32>
    %226 = arith.truncf %225 : vector<16x32xf32> to vector<16x32xbf16>
    %cst_57 = arith.constant dense<0.000000e+00> : vector<16x128xf32>
    %227 = tpu.matmul %226, %136, %cst_57 {dimension_numbers = #tpu.dot_dimension_numbers<[1], [0], [0], [1], [0, 0, 1, 1], [], []>} : vector<16x32xbf16>, vector<32x128xbf16>, vector<16x128xf32> -> vector<16x128xf32>
    %228 = vector.broadcast %150 : vector<1x128xf32> to vector<16x128xf32>
    %229 = arith.addf %227, %228 : vector<16x128xf32>
    %cst_58 = arith.constant 0.000000e+00 : f32
    %230 = vector.broadcast %cst_58 : f32 to vector<16x128xf32>
    %231 = arith.maximumf %229, %230 : vector<16x128xf32>
    %232 = arith.truncf %231 : vector<16x128xf32> to vector<16x128xbf16>
    %cst_59 = arith.constant dense<0.000000e+00> : vector<16x32xf32>
    %233 = tpu.matmul %232, %140, %cst_59 {dimension_numbers = #tpu.dot_dimension_numbers<[1], [0], [0], [1], [0, 0, 1, 1], [], []>} : vector<16x128xbf16>, vector<128x32xbf16>, vector<16x32xf32> -> vector<16x32xf32>
    %234 = vector.broadcast %147 : vector<1x32xf32> to vector<16x32xf32>
    %235 = arith.addf %233, %234 : vector<16x32xf32>
    %236 = arith.addf %225, %235 : vector<16x32xf32>
    %cst_60 = arith.constant dense<0.000000e+00> : vector<16xf32>
    %237 = vector.multi_reduction <add>, %236, %cst_60 [1] : vector<16x32xf32> to vector<16xf32>
    %238 = vector.shape_cast %237 : vector<16xf32> to vector<16x1xf32>
    %cst_61 = arith.constant 3.200000e+01 : f32
    %239 = vector.broadcast %cst_61 : f32 to vector<16x1xf32>
    %240 = arith.divf %238, %239 : vector<16x1xf32>
    %241 = vector.broadcast %240 : vector<16x1xf32> to vector<16x32xf32>
    %242 = arith.subf %236, %241 : vector<16x32xf32>
    %243 = arith.mulf %242, %242 : vector<16x32xf32>
    %cst_62 = arith.constant dense<0.000000e+00> : vector<16xf32>
    %244 = vector.multi_reduction <add>, %243, %cst_62 [1] : vector<16x32xf32> to vector<16xf32>
    %245 = vector.shape_cast %244 : vector<16xf32> to vector<16x1xf32>
    %cst_63 = arith.constant 3.200000e+01 : f32
    %246 = vector.broadcast %cst_63 : f32 to vector<16x1xf32>
    %247 = arith.divf %245, %246 : vector<16x1xf32>
    %248 = vector.broadcast %240 : vector<16x1xf32> to vector<16x32xf32>
    %249 = arith.subf %236, %248 : vector<16x32xf32>
    %cst_64 = arith.constant 9.99999974E-6 : f32
    %250 = vector.broadcast %cst_64 : f32 to vector<16x1xf32>
    %251 = arith.addf %247, %250 : vector<16x1xf32>
    %252 = math.rsqrt %251 : vector<16x1xf32>
    %253 = vector.broadcast %252 : vector<16x1xf32> to vector<16x32xf32>
    %254 = arith.mulf %249, %253 : vector<16x32xf32>
    %255 = vector.broadcast %148 : vector<1x32xf32> to vector<16x32xf32>
    %256 = arith.mulf %254, %255 : vector<16x32xf32>
    %257 = vector.broadcast %149 : vector<1x32xf32> to vector<16x32xf32>
    %258 = arith.addf %256, %257 : vector<16x32xf32>
    %c2 = arith.constant 2 : index
    %c0_65 = arith.constant 0 : index
    %c0_66 = arith.constant 0 : index
    %259 = vector.load %arg4[%c2, %c0_65, %c0_66] : memref<3x32x128xbf16, #tpu.memory_space<vmem>>, vector<1x32x128xbf16>
    %260 = vector.shape_cast %259 : vector<1x32x128xbf16> to vector<32x128xbf16>
    %261 = vector.extract_strided_slice %2 {offsets = [2, 0], sizes = [1, 128], strides = [1, 1]} : vector<3x128xf32> to vector<1x128xf32>
    %262 = arith.truncf %258 : vector<16x32xf32> to vector<16x32xbf16>
    %cst_67 = arith.constant dense<0.000000e+00> : vector<16x128xf32>
    %263 = tpu.matmul %262, %260, %cst_67 {dimension_numbers = #tpu.dot_dimension_numbers<[1], [0], [0], [1], [0, 0, 1, 1], [], []>} : vector<16x32xbf16>, vector<32x128xbf16>, vector<16x128xf32> -> vector<16x128xf32>
    %264 = vector.broadcast %261 : vector<1x128xf32> to vector<16x128xf32>
    %265 = arith.addf %263, %264 : vector<16x128xf32>
    %c0_68 = arith.constant 0 : index
    %c0_69 = arith.constant 0 : index
    %266 = vector.load %arg7[%c0_68, %c0_69] : memref<16x128xf32, #tpu.memory_space<vmem>>, vector<16x128xf32>
    tpu.vector_store %arg7[%c0_68, %c0_69], %265 {strides = array<i32>} : memref<16x128xf32, #tpu.memory_space<vmem>>, vector<16x128xf32>,
    return
  }
}

</mosaic_0001>

<llo_original>
// kernel: tpu_custom_call.1
$region0: #{tpu_custom_call.1}
  #allocation0 [shape = 'u32[]', space=smem, size = 0x4, offset = 0x4, fixed_abs, tag = 'smem constant byte address 0x4 - core index']
  #allocation1 [shape = 'u32[72,128]{1,0:T(1,128)}', space=vmem, size = 0x9000, scoped, tag = 'internal scratch']
  %s0 = inlined_call_operand.vmem [shape: f32[16,32], index: 0, kind: input, shape index: {}]
  %s1 = inlined_call_operand.vmem [shape: f32[64,64], index: 1, kind: input, shape index: {}]
  %s2 = inlined_call_operand.vmem [shape: bf16[2,32,96], index: 2, kind: input, shape index: {}]
  %s3 = inlined_call_operand.vmem [shape: bf16[2,160,32], index: 3, kind: input, shape index: {}]
  %s4 = inlined_call_operand.vmem [shape: bf16[3,32,128], index: 4, kind: input, shape index: {}]
  %s5 = inlined_call_operand.vmem [shape: f32[2,9,32], index: 5, kind: input, shape index: {}]
  %s6 = inlined_call_operand.vmem [shape: f32[3,128], index: 6, kind: input, shape index: {}]
  %s7 = inlined_call_operand.hbm [shape: f32[16,128], index: 7, kind: output, shape index: {}]
  %s8 = sld [smem:[#allocation0]]
  $region38: #{tpu_custom_call.1} parent=0
    _
  %s10 = ssub.s32 1, %s8
  %s11 = scalar_select 0, %s10, %s8
  $region1: #{tpu_custom_call.1} parent=0
    #allocation2 [shape = 'u8[8192]{0}', space=vmem, size = 0x2000, scoped, tag = 'output window, operand 0, single buffered']
    #allocation3 [shape = 's32[1]{0}', space=sflag, size = 0x4, scoped, tag = 'scoped memory for tpu_custom_call.1']
    %12 = vsyncpa [#allocation3], 0
    // Predicated region
    $region2: #{tpu_custom_call.1} parent=1 // pred_check
      _
    $region3: #{tpu_custom_call.1} parent=1 // pred_check_branch
      %14 = sbr.rel (0) target = $region5
    $region4: #{tpu_custom_call.1} parent=1 // pred_region
      _
    $region5: #{tpu_custom_call.1} parent=1 // pred_fallthru
      _
    // Predicated region
    $region6: #{tpu_custom_call.1} parent=1 // pred_check
      _
    $region7: #{tpu_custom_call.1} parent=1 // pred_check_branch
      %16 = sbr.rel (0) target = $region9
    $region8: #{tpu_custom_call.1} parent=1 // pred_region
      _
    $region9: #{tpu_custom_call.1} parent=1 // pred_fallthru
      _
    // Predicated region
    $region10: #{tpu_custom_call.1} parent=1 // pred_check
      _
    $region11: #{tpu_custom_call.1} parent=1 // pred_check_branch
      %18 = sbr.rel (0) target = $region13
    $region12: #{tpu_custom_call.1} parent=1 // pred_region
      _
    $region13: #{tpu_custom_call.1} parent=1 // pred_fallthru
      _
    // Predicated region
    $region14: #{tpu_custom_call.1} parent=1 // pred_check
      _
    $region15: #{tpu_custom_call.1} parent=1 // pred_check_branch
      %20 = sbr.rel (0) target = $region17
    $region16: #{tpu_custom_call.1} parent=1 // pred_region
      _
    $region17: #{tpu_custom_call.1} parent=1 // pred_fallthru
      _
    // Predicated region
    $region18: #{tpu_custom_call.1} parent=1 // pred_check
      _
    $region19: #{tpu_custom_call.1} parent=1 // pred_check_branch
      %22 = sbr.rel (0) target = $region21
    $region20: #{tpu_custom_call.1} parent=1 // pred_region
      _
    $region21: #{tpu_custom_call.1} parent=1 // pred_fallthru
      _
    // Predicated region
    $region22: #{tpu_custom_call.1} parent=1 // pred_check
      _
    $region23: #{tpu_custom_call.1} parent=1 // pred_check_branch
      %24 = sbr.rel (0) target = $region25
    $region24: #{tpu_custom_call.1} parent=1 // pred_region
      _
    $region25: #{tpu_custom_call.1} parent=1 // pred_fallthru
      _
    // Predicated region
    $region26: #{tpu_custom_call.1} parent=1 // pred_check
      _
    $region27: #{tpu_custom_call.1} parent=1 // pred_check_branch
      %26 = sbr.rel (0) target = $region29
    $region28: #{tpu_custom_call.1} parent=1 // pred_region
      _
    $region29: #{tpu_custom_call.1} parent=1 // pred_fallthru
      _
    %v28 = vld [vmem:[%s0] sm:$0xff]
    %v29 = vld [vmem:[%s0 + $0x8] sm:$0xff]
    %v30 = vld [vmem:[%s1] sm:$0xff]
    %v31 = vld [vmem:[%s1 + $0x8] sm:$0xff]
    %v32 = vld [vmem:[%s1 + $0x10] sm:$0xff]
    %v33 = vld [vmem:[%s1 + $0x18] sm:$0xff]
    %v34 = vld [vmem:[%s1 + $0x20] sm:$0xff]
    %v35 = vld [vmem:[%s1 + $0x28] sm:$0xff]
    %v36 = vld [vmem:[%s1 + $0x30] sm:$0xff]
    %v37 = vld [vmem:[%s1 + $0x38] sm:$0xff]
    %v38 = vld [vmem:[%s6] sm:$0x7]
    %v39 = vld [vmem:[%s2] sm:$0xf]
    %v40 = vld [vmem:[%s2 + $0x4] sm:$0xf]
    %v41 = vld [vmem:[%s2 + $0x8] sm:$0xf]
    %v42 = vld [vmem:[%s2 + $0xc] sm:$0xf]
    %v43 = vld [vmem:[%s3] sm:$0xf]
    %v44 = vld [vmem:[%s3 + $0x4] sm:$0xf]
    %v45 = vld [vmem:[%s3 + $0x8] sm:$0xf]
    %v46 = vld [vmem:[%s3 + $0xc] sm:$0xf]
    %v47 = vld [vmem:[%s3 + $0x10] sm:$0xf]
    %v48 = vld [vmem:[%s3 + $0x14] sm:$0xf]
    %v49 = vld [vmem:[%s3 + $0x18] sm:$0xf]
    %v50 = vld [vmem:[%s3 + $0x1c] sm:$0xf]
    %v51 = vld [vmem:[%s3 + $0x20] sm:$0xf]
    %v52 = vld [vmem:[%s3 + $0x24] sm:$0xf]
    %v53 = vld [vmem:[%s3 + $0x28] sm:$0xf]
    %v54 = vld [vmem:[%s3 + $0x2c] sm:$0xf]
    %v55 = vld [vmem:[%s3 + $0x30] sm:$0xf]
    %v56 = vld [vmem:[%s3 + $0x34] sm:$0xf]
    %v57 = vld [vmem:[%s3 + $0x38] sm:$0xf]
    %v58 = vld [vmem:[%s3 + $0x3c] sm:$0xf]
    %v59 = vld [vmem:[%s3 + $0x40] sm:$0xf]
    %v60 = vld [vmem:[%s3 + $0x44] sm:$0xf]
    %v61 = vld [vmem:[%s3 + $0x48] sm:$0xf]
    %v62 = vld [vmem:[%s3 + $0x4c] sm:$0xf]
    %v63 = vld [vmem:[%s4] sm:$0xf]
    %v64 = vld [vmem:[%s4 + $0x4] sm:$0xf]
    %v65 = vld [vmem:[%s4 + $0x8] sm:$0xf]
    %v66 = vld [vmem:[%s4 + $0xc] sm:$0xf]
    %v67 = vld [vmem:[%s5] sm:$0xff]
    %v68 = vld [vmem:[%s5 + $0x8] sm:$0x1]
    %v69 = vpack.c.bf16 %v29, %v28
    %v74 = vunpack.c.l.b16 %v39
    %v75 = vunpack.c.l.b16 %v40
    %v76 = vunpack.c.l.b16 %v41
    %v77 = vunpack.c.l.b16 %v42
    %v78 = vpack.c.b16 %v75, %v74
    %v79 = vpack.c.b16 %v77, %v76
    %vm82 = vcmask 261120
    %v84 = vsel %vm82, %v69, 0
    %86 = vmatpush.bf16.msra.mxu0 0
    %87 = vmatpush.bf16.msra.mxu0 0
    %88 = vmatpush.bf16.msra.mxu0 0
    %89 = vmatpush.bf16.msra.mxu0 0
    %90 = vmatpush.bf16.msra.mxu0 0
    %91 = vmatpush.bf16.msra.mxu0 0
    %92 = vmatpush.bf16.msra.mxu0 %v79
    %93 = vmatpush.bf16.msra.mxu0 %v78
    %94 = vmatmul.bf16.gmra.mxu0 %v84
    %v95 = vpop.f32.mrf.mxu0
    %v96 = vadd.f32 0.0, %v95
    %v97 = vpop.f32.mrf.mxu0
    %v98 = vadd.f32 0.0, %v97
    %99 = vdwg.mxu0
    %v100 = vperm.slane %v67, 0
    %v101 = vadd.f32 %v96, %v100
    %v102 = vadd.f32 %v98, %v100
    %v103 = vperm.slane %v67, 1
    %105 = vrot.lane.b32.xlu0 %v103, 32
    %v106 = vpop.permute.xlu0 %105
    %v108 = vadd.f32 %v96, %v106
    %v109 = vadd.f32 %v98, %v106
    %v110 = vperm.slane %v67, 2
    %112 = vrot.lane.b32.xlu0 %v110, 64
    %v113 = vpop.permute.xlu0 %112
    %v115 = vadd.f32 %v96, %v113
    %v116 = vadd.f32 %v98, %v113
    %119 = vrot.lane.b32.xlu0 %v101, 120
    %v120 = vpop.permute.xlu0 %119
    %121 = vrot.lane.b32.xlu0 %v102, 120
    %v122 = vpop.permute.xlu0 %121
    %125 = vrot.lane.b32.xlu0 %v101, 112
    %v126 = vpop.permute.xlu0 %125
    %127 = vrot.lane.b32.xlu0 %v102, 112
    %v128 = vpop.permute.xlu0 %127
    %131 = vrot.lane.b32.xlu0 %v101, 104
    %v132 = vpop.permute.xlu0 %131
    %133 = vrot.lane.b32.xlu0 %v102, 104
    %v134 = vpop.permute.xlu0 %133
    %v137 = vpack.c.bf16 %v102, %v101
    %v138 = vpack.c.bf16 %v122, %v120
    %v139 = vpack.c.bf16 %v128, %v126
    %v140 = vpack.c.bf16 %v134, %v132
    %143 = vrot.lane.b32.xlu0 %v108, 120
    %v144 = vpop.permute.xlu0 %143
    %145 = vrot.lane.b32.xlu0 %v109, 120
    %v146 = vpop.permute.xlu0 %145
    %149 = vrot.lane.b32.xlu0 %v108, 112
    %v150 = vpop.permute.xlu0 %149
    %151 = vrot.lane.b32.xlu0 %v109, 112
    %v152 = vpop.permute.xlu0 %151
    %155 = vrot.lane.b32.xlu0 %v108, 104
    %v156 = vpop.permute.xlu0 %155
    %157 = vrot.lane.b32.xlu0 %v109, 104
    %v158 = vpop.permute.xlu0 %157
    %v161 = vpack.c.bf16 %v109, %v108
    %v162 = vpack.c.bf16 %v146, %v144
    %v163 = vpack.c.bf16 %v152, %v150
    %v164 = vpack.c.bf16 %v158, %v156
    %167 = vrot.lane.b32.xlu0 %v115, 120
    %v168 = vpop.permute.xlu0 %167
    %169 = vrot.lane.b32.xlu0 %v116, 120
    %v170 = vpop.permute.xlu0 %169
    %173 = vrot.lane.b32.xlu0 %v115, 112
    %v174 = vpop.permute.xlu0 %173
    %175 = vrot.lane.b32.xlu0 %v116, 112
    %v176 = vpop.permute.xlu0 %175
    %179 = vrot.lane.b32.xlu0 %v115, 104
    %v180 = vpop.permute.xlu0 %179
    %181 = vrot.lane.b32.xlu0 %v116, 104
    %v182 = vpop.permute.xlu0 %181
    %v185 = vpack.c.bf16 %v116, %v115
    %v186 = vpack.c.bf16 %v170, %v168
    %v187 = vpack.c.bf16 %v176, %v174
    %v188 = vpack.c.bf16 %v182, %v180
    %193 = vrot.lane.b32.xlu0 %v161, 96
    %v194 = vpop.permute.xlu0 %193
    %195 = vrot.lane.b32.xlu0 %v162, 96
    %v196 = vpop.permute.xlu0 %195
    %197 = vrot.lane.b32.xlu0 %v163, 96
    %v198 = vpop.permute.xlu0 %197
    %199 = vrot.lane.b32.xlu0 %v164, 96
    %v200 = vpop.permute.xlu0 %199
    %vm201 = vcmask 64512
    %v203 = vsel %vm201, %v137, 0
    %v206 = vsel %vm201, %v138, 0
    %v209 = vsel %vm201, %v139, 0
    %v212 = vsel %vm201, %v140, 0
    %v215 = vsel %vm201, %v194, 0
    %v218 = vsel %vm201, %v196, 0
    %v221 = vsel %vm201, %v198, 0
    %v224 = vsel %vm201, %v200, 0
    %226 = vmatpush.bf16.xpose.msra.mxu0 0
    %227 = vmatpush.bf16.xpose.msra.mxu0 0
    %228 = vmatpush.bf16.xpose.msra.mxu0 0
    %229 = vmatpush.bf16.xpose.msra.mxu0 0
    %230 = vmatpush.bf16.xpose.msra.mxu0 %v224
    %231 = vmatpush.bf16.xpose.msra.mxu0 %v221
    %232 = vmatpush.bf16.xpose.msra.mxu0 %v218
    %233 = vmatpush.bf16.xpose.msra.mxu0 %v215
    %234 = vmatmul.bf16.gmra.mxu0 %v203
    %v235 = vpop.f32.mrf.mxu0
    %v236 = vadd.f32 %v30, %v235
    %v237 = vpop.f32.mrf.mxu0
    %v238 = vadd.f32 %v31, %v237
    %239 = vmatmul.bf16.gmra.mxu0 %v206
    %v240 = vpop.f32.mrf.mxu0
    %v241 = vadd.f32 %v32, %v240
    %v242 = vpop.f32.mrf.mxu0
    %v243 = vadd.f32 %v33, %v242
    %244 = vmatmul.bf16.gmra.mxu0 %v209
    %v245 = vpop.f32.mrf.mxu0
    %v246 = vadd.f32 %v34, %v245
    %v247 = vpop.f32.mrf.mxu0
    %v248 = vadd.f32 %v35, %v247
    %249 = vmatmul.bf16.gmra.mxu0 %v212
    %v250 = vpop.f32.mrf.mxu0
    %v251 = vadd.f32 %v36, %v250
    %v252 = vpop.f32.mrf.mxu0
    %v253 = vadd.f32 %v37, %v252
    %254 = vdwg.mxu0
    %vm255 = vcmask 523264
    %v256 = vsel %vm255, %v236, -inf
    %257 = vmax.xlane.f32.xlu0 %v256
    %v258 = vpop.xlane.xlu0 %257
    %v259 = vsel %vm255, %v238, -inf
    %260 = vmax.xlane.f32.xlu0 %v259
    %v261 = vpop.xlane.xlu0 %260
    %v262 = vsel %vm255, %v241, -inf
    %263 = vmax.xlane.f32.xlu0 %v262
    %v264 = vpop.xlane.xlu0 %263
    %v265 = vsel %vm255, %v243, -inf
    %266 = vmax.xlane.f32.xlu0 %v265
    %v267 = vpop.xlane.xlu0 %266
    %v268 = vsel %vm255, %v246, -inf
    %269 = vmax.xlane.f32.xlu0 %v268
    %v270 = vpop.xlane.xlu0 %269
    %v271 = vsel %vm255, %v248, -inf
    %272 = vmax.xlane.f32.xlu0 %v271
    %v273 = vpop.xlane.xlu0 %272
    %v274 = vsel %vm255, %v251, -inf
    %275 = vmax.xlane.f32.xlu0 %v274
    %v276 = vpop.xlane.xlu0 %275
    %v277 = vsel %vm255, %v253, -inf
    %278 = vmax.xlane.f32.xlu0 %v277
    %v279 = vpop.xlane.xlu0 %278
    %v280 = vsub.f32 %v236, %v258
    %v281 = vsub.f32 %v238, %v261
    %v282 = vsub.f32 %v241, %v264
    %v283 = vsub.f32 %v243, %v267
    %v284 = vsub.f32 %v246, %v270
    %v285 = vsub.f32 %v248, %v273
    %v286 = vsub.f32 %v251, %v276
    %v287 = vsub.f32 %v253, %v279
    %v288 = vmul.f32 %v280, 1.442695
    %v289 = vpow.pop %v288
    %v290 = vmul.f32 %v281, 1.442695
    %v291 = vpow.pop %v290
    %v292 = vmul.f32 %v282, 1.442695
    %v293 = vpow.pop %v292
    %v294 = vmul.f32 %v283, 1.442695
    %v295 = vpow.pop %v294
    %v296 = vmul.f32 %v284, 1.442695
    %v297 = vpow.pop %v296
    %v298 = vmul.f32 %v285, 1.442695
    %v299 = vpow.pop %v298
    %v300 = vmul.f32 %v286, 1.442695
    %v301 = vpow.pop %v300
    %v302 = vmul.f32 %v287, 1.442695
    %v303 = vpow.pop %v302
    %v304 = vsel %vm255, %v289, 0.0
    %305 = vadd.xlane.f32.xlu0 %v304
    %v306 = vpop.xlane.xlu0 %305
    %v307 = vsel %vm255, %v291, 0.0
    %308 = vadd.xlane.f32.xlu0 %v307
    %v309 = vpop.xlane.xlu0 %308
    %v310 = vsel %vm255, %v293, 0.0
    %311 = vadd.xlane.f32.xlu0 %v310
    %v312 = vpop.xlane.xlu0 %311
    %v313 = vsel %vm255, %v295, 0.0
    %314 = vadd.xlane.f32.xlu0 %v313
    %v315 = vpop.xlane.xlu0 %314
    %v316 = vsel %vm255, %v297, 0.0
    %317 = vadd.xlane.f32.xlu0 %v316
    %v318 = vpop.xlane.xlu0 %317
    %v319 = vsel %vm255, %v299, 0.0
    %320 = vadd.xlane.f32.xlu0 %v319
    %v321 = vpop.xlane.xlu0 %320
    %v322 = vsel %vm255, %v301, 0.0
    %323 = vadd.xlane.f32.xlu0 %v322
    %v324 = vpop.xlane.xlu0 %323
    %v325 = vsel %vm255, %v303, 0.0
    %326 = vadd.xlane.f32.xlu0 %v325
    %v327 = vpop.xlane.xlu0 %326
    %v328 = vrcp.pop %v306
    %v329 = vrcp.pop %v309
    %v330 = vrcp.pop %v312
    %v331 = vrcp.pop %v315
    %v332 = vrcp.pop %v318
    %v333 = vrcp.pop %v321
    %v334 = vrcp.pop %v324
    %v335 = vrcp.pop %v327
    %v336 = vmul.f32 %v289, %v328
    %v337 = vmul.f32 %v291, %v329
    %v338 = vmul.f32 %v293, %v330
    %v339 = vmul.f32 %v295, %v331
    %v340 = vmul.f32 %v297, %v332
    %v341 = vmul.f32 %v299, %v333
    %v342 = vmul.f32 %v301, %v334
    %v343 = vmul.f32 %v303, %v335
    %v344 = vpack.c.bf16 %v337, %v336
    %v345 = vpack.c.bf16 %v339, %v338
    %v346 = vpack.c.bf16 %v341, %v340
    %v347 = vpack.c.bf16 %v343, %v342
    %352 = vrot.lane.b32.xlu0 %v185, 64
    %v353 = vpop.permute.xlu0 %352
    %354 = vrot.lane.b32.xlu0 %v186, 64
    %v355 = vpop.permute.xlu0 %354
    %356 = vrot.lane.b32.xlu0 %v187, 64
    %v357 = vpop.permute.xlu0 %356
    %358 = vrot.lane.b32.xlu0 %v188, 64
    %v359 = vpop.permute.xlu0 %358
    %v365 = vsel %vm255, %v344, 0
    %v368 = vsel %vm255, %v345, 0
    %v371 = vsel %vm255, %v346, 0
    %v374 = vsel %vm255, %v347, 0
    %376 = vmatpush.bf16.msra.mxu0 0
    %377 = vmatpush.bf16.msra.mxu0 0
    %378 = vmatpush.bf16.msra.mxu0 0
    %379 = vmatpush.bf16.msra.mxu0 0
    %380 = vmatpush.bf16.msra.mxu0 %v359
    %381 = vmatpush.bf16.msra.mxu0 %v357
    %382 = vmatpush.bf16.msra.mxu0 %v355
    %383 = vmatpush.bf16.msra.mxu0 %v353
    %384 = vmatmul.bf16.gmra.mxu0 %v365
    %v385 = vpop.f32.mrf.mxu0
    %v386 = vadd.f32 0.0, %v385
    %v387 = vpop.f32.mrf.mxu0
    %v388 = vadd.f32 0.0, %v387
    %389 = vmatmul.bf16.gmra.mxu0 %v368
    %v390 = vpop.f32.mrf.mxu0
    %v391 = vadd.f32 0.0, %v390
    %v392 = vpop.f32.mrf.mxu0
    %v393 = vadd.f32 0.0, %v392
    %394 = vmatmul.bf16.gmra.mxu0 %v371
    %v395 = vpop.f32.mrf.mxu0
    %v396 = vadd.f32 0.0, %v395
    %v397 = vpop.f32.mrf.mxu0
    %v398 = vadd.f32 0.0, %v397
    %399 = vmatmul.bf16.gmra.mxu0 %v374
    %v400 = vpop.f32.mrf.mxu0
    %v401 = vadd.f32 0.0, %v400
    %v402 = vpop.f32.mrf.mxu0
    %v403 = vadd.f32 0.0, %v402
    %404 = vdwg.mxu0
    %407 = vrot.lane.b32.xlu0 %v391, 8
    %v408 = vpop.permute.xlu0 %407
    %409 = vrot.lane.b32.xlu0 %v393, 8
    %v410 = vpop.permute.xlu0 %409
    %415 = vrot.lane.b32.xlu0 %v396, 16
    %v416 = vpop.permute.xlu0 %415
    %417 = vrot.lane.b32.xlu0 %v398, 16
    %v418 = vpop.permute.xlu0 %417
    %423 = vrot.lane.b32.xlu0 %v401, 24
    %v424 = vpop.permute.xlu0 %423
    %425 = vrot.lane.b32.xlu0 %v403, 24
    %v426 = vpop.permute.xlu0 %425
    %v429 = vsel %vm201, %v386, %v408
    %v430 = vsel %vm201, %v388, %v410
    %vm431 = vcmask 130048
    %v432 = vsel %vm431, %v429, %v416
    %v433 = vsel %vm431, %v430, %v418
    %vm434 = vcmask 195584
    %v435 = vsel %vm434, %v432, %v424
    %v436 = vsel %vm434, %v433, %v426
    %v437 = vpack.c.bf16 %v436, %v435
    %v438 = vperm.slane %v67, 3
    %v443 = vunpack.c.l.b16 %v43
    %v444 = vunpack.c.l.b16 %v44
    %v445 = vunpack.c.l.b16 %v45
    %v446 = vunpack.c.l.b16 %v46
    %v447 = vpack.c.b16 %v444, %v443
    %v448 = vpack.c.b16 %v446, %v445
    %v452 = vsel %vm82, %v437, 0
    %454 = vmatpush.bf16.msra.mxu0 0
    %455 = vmatpush.bf16.msra.mxu0 0
    %456 = vmatpush.bf16.msra.mxu0 0
    %457 = vmatpush.bf16.msra.mxu0 0
    %458 = vmatpush.bf16.msra.mxu0 0
    %459 = vmatpush.bf16.msra.mxu0 0
    %460 = vmatpush.bf16.msra.mxu0 %v448
    %461 = vmatpush.bf16.msra.mxu0 %v447
    %462 = vmatmul.bf16.gmra.mxu0 %v452
    %v463 = vpop.f32.mrf.mxu0
    %v464 = vadd.f32 %v438, %v463
    %v465 = vpop.f32.mrf.mxu0
    %v466 = vadd.f32 %v438, %v465
    %467 = vdwg.mxu0
    %v468 = vadd.f32 %v28, %v464
    %v469 = vadd.f32 %v29, %v466
    %v470 = vsel %vm82, %v468, 0.0
    %471 = vadd.xlane.f32.xlu0 %v470
    %v472 = vpop.xlane.xlu0 %471
    %v473 = vsel %vm82, %v469, 0.0
    %474 = vadd.xlane.f32.xlu0 %v473
    %v475 = vpop.xlane.xlu0 %474
    %v476 = vrcp.pop 32.0
    %v477 = vmul.f32 32.0, %v476
    %v478 = vsub.f32 1.0, %v477
    %v479 = vmul.f32 %v476, %v478
    %v480 = vadd.f32 %v476, %v479
    %vm481 = vweird.f32 %v476
    %v482 = vsel %vm481, %v476, %v480
    %v483 = vmul.f32 %v472, %v482
    %v484 = vmul.f32 %v475, %v482
    %v485 = vsub.f32 %v468, %v483
    %v486 = vsub.f32 %v469, %v484
    %v487 = vmul.f32 %v485, %v485
    %v488 = vmul.f32 %v486, %v486
    %v489 = vsel %vm82, %v487, 0.0
    %490 = vadd.xlane.f32.xlu0 %v489
    %v491 = vpop.xlane.xlu0 %490
    %v492 = vsel %vm82, %v488, 0.0
    %493 = vadd.xlane.f32.xlu0 %v492
    %v494 = vpop.xlane.xlu0 %493
    %v495 = vmul.f32 %v491, %v482
    %v496 = vmul.f32 %v494, %v482
    %v497 = vadd.f32 %v495, 1e-05
    %v498 = vadd.f32 %v496, 1e-05
    %v499 = vrsqrt.pop %v497
    %v500 = vmul.f32 %v499, %v497
    %v501 = vmul.f32 %v500, %v499
    %v502 = vmul.f32 0.5, %v501
    %v503 = vsub.f32 1.5, %v502
    %v504 = vmul.f32 %v499, %v503
    %vm505 = vweird.f32 %v497
    %vm506 = vweird.f32 %v499
    %vm507 = vmor %vm505, %vm506
    %v508 = vsel %vm507, %v499, %v504
    %v509 = vrsqrt.pop %v498
    %v510 = vmul.f32 %v509, %v498
    %v511 = vmul.f32 %v510, %v509
    %v512 = vmul.f32 0.5, %v511
    %v513 = vsub.f32 1.5, %v512
    %v514 = vmul.f32 %v509, %v513
    %vm515 = vweird.f32 %v498
    %vm516 = vweird.f32 %v509
    %vm517 = vmor %vm515, %vm516
    %v518 = vsel %vm517, %v509, %v514
    %v519 = vmul.f32 %v485, %v508
    %v520 = vmul.f32 %v486, %v518
    %v521 = vperm.slane %v67, 4
    %v522 = vmul.f32 %v519, %v521
    %v523 = vmul.f32 %v520, %v521
    %v524 = vperm.slane %v67, 5
    %v525 = vadd.f32 %v522, %v524
    %v526 = vadd.f32 %v523, %v524
    %v527 = vpack.c.bf16 %v526, %v525
    %v528 = vperm.slane %v38, 0
    %v533 = vunpack.c.l.b16 %v63
    %v534 = vunpack.c.l.b16 %v64
    %v535 = vunpack.c.l.b16 %v65
    %v536 = vunpack.c.l.b16 %v66
    %v537 = vpack.c.b16 %v534, %v533
    %v538 = vpack.c.b16 %v536, %v535
    %v542 = vsel %vm82, %v527, 0
    %544 = vmatpush.bf16.msra.mxu0 0
    %545 = vmatpush.bf16.msra.mxu0 0
    %546 = vmatpush.bf16.msra.mxu0 0
    %547 = vmatpush.bf16.msra.mxu0 0
    %548 = vmatpush.bf16.msra.mxu0 0
    %549 = vmatpush.bf16.msra.mxu0 0
    %550 = vmatpush.bf16.msra.mxu0 %v538
    %551 = vmatpush.bf16.msra.mxu0 %v537
    %552 = vmatmul.bf16.gmra.mxu0 %v542
    %v553 = vpop.f32.mrf.mxu0
    %v554 = vadd.f32 %v528, %v553
    %v555 = vpop.f32.mrf.mxu0
    %v556 = vadd.f32 %v528, %v555
    %557 = vdwg.mxu0
    %v558 = vmax.f32 %v554, 0.0
    %v559 = vmax.f32 %v556, 0.0
    %v560 = vpack.c.bf16 %v559, %v558
    %v561 = vperm.slane %v67, 6
    %v578 = vunpack.c.l.b16 %v47
    %v579 = vunpack.c.l.b16 %v48
    %v580 = vunpack.c.l.b16 %v49
    %v581 = vunpack.c.l.b16 %v50
    %v582 = vunpack.c.l.b16 %v51
    %v583 = vunpack.c.l.b16 %v52
    %v584 = vunpack.c.l.b16 %v53
    %v585 = vunpack.c.l.b16 %v54
    %v586 = vunpack.c.l.b16 %v55
    %v587 = vunpack.c.l.b16 %v56
    %v588 = vunpack.c.l.b16 %v57
    %v589 = vunpack.c.l.b16 %v58
    %v590 = vunpack.c.l.b16 %v59
    %v591 = vunpack.c.l.b16 %v60
    %v592 = vunpack.c.l.b16 %v61
    %v593 = vunpack.c.l.b16 %v62
    %v594 = vpack.c.b16 %v579, %v578
    %v595 = vpack.c.b16 %v581, %v580
    %v596 = vpack.c.b16 %v583, %v582
    %v597 = vpack.c.b16 %v585, %v584
    %v598 = vpack.c.b16 %v587, %v586
    %v599 = vpack.c.b16 %v589, %v588
    %v600 = vpack.c.b16 %v591, %v590
    %v601 = vpack.c.b16 %v593, %v592
    %610 = vmatpush.bf16.msra.mxu0 %v601
    %611 = vmatpush.bf16.msra.mxu0 %v600
    %612 = vmatpush.bf16.msra.mxu0 %v599
    %613 = vmatpush.bf16.msra.mxu0 %v598
    %614 = vmatpush.bf16.msra.mxu0 %v597
    %615 = vmatpush.bf16.msra.mxu0 %v596
    %616 = vmatpush.bf16.msra.mxu0 %v595
    %617 = vmatpush.bf16.msra.mxu0 %v594
    %618 = vmatmul.bf16.gmra.mxu0 %v560
    %v619 = vpop.f32.mrf.mxu0
    %v620 = vadd.f32 %v561, %v619
    %v621 = vpop.f32.mrf.mxu0
    %v622 = vadd.f32 %v561, %v621
    %623 = vdwg.mxu0
    %v624 = vadd.f32 %v525, %v620
    %v625 = vadd.f32 %v526, %v622
    %v626 = vsel %vm82, %v624, 0.0
    %627 = vadd.xlane.f32.xlu0 %v626
    %v628 = vpop.xlane.xlu0 %627
    %v629 = vsel %vm82, %v625, 0.0
    %630 = vadd.xlane.f32.xlu0 %v629
    %v631 = vpop.xlane.xlu0 %630
    %v632 = vmul.f32 %v628, %v482
    %v633 = vmul.f32 %v631, %v482
    %v634 = vsub.f32 %v624, %v632
    %v635 = vsub.f32 %v625, %v633
    %v636 = vmul.f32 %v634, %v634
    %v637 = vmul.f32 %v635, %v635
    %v638 = vsel %vm82, %v636, 0.0
    %639 = vadd.xlane.f32.xlu0 %v638
    %v640 = vpop.xlane.xlu0 %639
    %v641 = vsel %vm82, %v637, 0.0
    %642 = vadd.xlane.f32.xlu0 %v641
    %v643 = vpop.xlane.xlu0 %642
    %v644 = vmul.f32 %v640, %v482
    %v645 = vmul.f32 %v643, %v482
    %v646 = vadd.f32 %v644, 1e-05
    %v647 = vadd.f32 %v645, 1e-05
    %v648 = vrsqrt.pop %v646
    %v649 = vmul.f32 %v648, %v646
    %v650 = vmul.f32 %v649, %v648
    %v651 = vmul.f32 0.5, %v650
    %v652 = vsub.f32 1.5, %v651
    %v653 = vmul.f32 %v648, %v652
    %vm654 = vweird.f32 %v646
    %vm655 = vweird.f32 %v648
    %vm656 = vmor %vm654, %vm655
    %v657 = vsel %vm656, %v648, %v653
    %v658 = vrsqrt.pop %v647
    %v659 = vmul.f32 %v658, %v647
    %v660 = vmul.f32 %v659, %v658
    %v661 = vmul.f32 0.5, %v660
    %v662 = vsub.f32 1.5, %v661
    %v663 = vmul.f32 %v658, %v662
    %vm664 = vweird.f32 %v647
    %vm665 = vweird.f32 %v658
    %vm666 = vmor %vm664, %vm665
    %v667 = vsel %vm666, %v658, %v663
    %v668 = vmul.f32 %v634, %v657
    %v669 = vmul.f32 %v635, %v667
    %v670 = vperm.slane %v67, 7
    %v671 = vmul.f32 %v668, %v670
    %v672 = vmul.f32 %v669, %v670
    %v673 = vperm.slane %v68, 0
    %v674 = vadd.f32 %v671, %v673
    %v675 = vadd.f32 %v672, %v673
    %s676 = scalar_lea.vmem %s2, 16
    %v677 = vld [vmem:[%s676] sm:$0xf]
    %v678 = vld [vmem:[%s676 + $0x4] sm:$0xf]
    %v679 = vld [vmem:[%s676 + $0x8] sm:$0xf]
    %v680 = vld [vmem:[%s676 + $0xc] sm:$0xf]
    %s681 = scalar_lea.vmem %s3, 80
    %v682 = vld [vmem:[%s681] sm:$0xf]
    %v683 = vld [vmem:[%s681 + $0x4] sm:$0xf]
    %v684 = vld [vmem:[%s681 + $0x8] sm:$0xf]
    %v685 = vld [vmem:[%s681 + $0xc] sm:$0xf]
    %v686 = vld [vmem:[%s681 + $0x10] sm:$0xf]
    %v687 = vld [vmem:[%s681 + $0x14] sm:$0xf]
    %v688 = vld [vmem:[%s681 + $0x18] sm:$0xf]
    %v689 = vld [vmem:[%s681 + $0x1c] sm:$0xf]
    %v690 = vld [vmem:[%s681 + $0x20] sm:$0xf]
    %v691 = vld [vmem:[%s681 + $0x24] sm:$0xf]
    %v692 = vld [vmem:[%s681 + $0x28] sm:$0xf]
    %v693 = vld [vmem:[%s681 + $0x2c] sm:$0xf]
    %v694 = vld [vmem:[%s681 + $0x30] sm:$0xf]
    %v695 = vld [vmem:[%s681 + $0x34] sm:$0xf]
    %v696 = vld [vmem:[%s681 + $0x38] sm:$0xf]
    %v697 = vld [vmem:[%s681 + $0x3c] sm:$0xf]
    %v698 = vld [vmem:[%s681 + $0x40] sm:$0xf]
    %v699 = vld [vmem:[%s681 + $0x44] sm:$0xf]
    %v700 = vld [vmem:[%s681 + $0x48] sm:$0xf]
    %v701 = vld [vmem:[%s681 + $0x4c] sm:$0xf]
    %s702 = scalar_lea.vmem %s4, 16
    %v703 = vld [vmem:[%s702] sm:$0xf]
    %v704 = vld [vmem:[%s702 + $0x4] sm:$0xf]
    %v705 = vld [vmem:[%s702 + $0x8] sm:$0xf]
    %v706 = vld [vmem:[%s702 + $0xc] sm:$0xf]
    %s707 = scalar_lea.vmem %s5, 16
    %v708 = vld [vmem:[%s707] sm:$0xff]
    %v709 = vld [vmem:[%s707 + $0x8] sm:$0x1]
    %v710 = vpack.c.bf16 %v675, %v674
    %v715 = vunpack.c.l.b16 %v677
    %v716 = vunpack.c.l.b16 %v678
    %v717 = vunpack.c.l.b16 %v679
    %v718 = vunpack.c.l.b16 %v680
    %v719 = vpack.c.b16 %v716, %v715
    %v720 = vpack.c.b16 %v718, %v717
    %v724 = vsel %vm82, %v710, 0
    %726 = vmatpush.bf16.msra.mxu0 0
    %727 = vmatpush.bf16.msra.mxu0 0
    %728 = vmatpush.bf16.msra.mxu0 0
    %729 = vmatpush.bf16.msra.mxu0 0
    %730 = vmatpush.bf16.msra.mxu0 0
    %731 = vmatpush.bf16.msra.mxu0 0
    %732 = vmatpush.bf16.msra.mxu0 %v720
    %733 = vmatpush.bf16.msra.mxu0 %v719
    %734 = vmatmul.bf16.gmra.mxu0 %v724
    %v735 = vpop.f32.mrf.mxu0
    %v736 = vadd.f32 0.0, %v735
    %v737 = vpop.f32.mrf.mxu0
    %v738 = vadd.f32 0.0, %v737
    %739 = vdwg.mxu0
    %v740 = vperm.slane %v708, 0
    %v741 = vadd.f32 %v736, %v740
    %v742 = vadd.f32 %v738, %v740
    %v743 = vperm.slane %v708, 1
    %745 = vrot.lane.b32.xlu0 %v743, 32
    %v746 = vpop.permute.xlu0 %745
    %v748 = vadd.f32 %v736, %v746
    %v749 = vadd.f32 %v738, %v746
    %v750 = vperm.slane %v708, 2
    %752 = vrot.lane.b32.xlu0 %v750, 64
    %v753 = vpop.permute.xlu0 %752
    %v755 = vadd.f32 %v736, %v753
    %v756 = vadd.f32 %v738, %v753
    %759 = vrot.lane.b32.xlu0 %v741, 120
    %v760 = vpop.permute.xlu0 %759
    %761 = vrot.lane.b32.xlu0 %v742, 120
    %v762 = vpop.permute.xlu0 %761
    %765 = vrot.lane.b32.xlu0 %v741, 112
    %v766 = vpop.permute.xlu0 %765
    %767 = vrot.lane.b32.xlu0 %v742, 112
    %v768 = vpop.permute.xlu0 %767
    %771 = vrot.lane.b32.xlu0 %v741, 104
    %v772 = vpop.permute.xlu0 %771
    %773 = vrot.lane.b32.xlu0 %v742, 104
    %v774 = vpop.permute.xlu0 %773
    %v777 = vpack.c.bf16 %v742, %v741
    %v778 = vpack.c.bf16 %v762, %v760
    %v779 = vpack.c.bf16 %v768, %v766
    %v780 = vpack.c.bf16 %v774, %v772
    %783 = vrot.lane.b32.xlu0 %v748, 120
    %v784 = vpop.permute.xlu0 %783
    %785 = vrot.lane.b32.xlu0 %v749, 120
    %v786 = vpop.permute.xlu0 %785
    %789 = vrot.lane.b32.xlu0 %v748, 112
    %v790 = vpop.permute.xlu0 %789
    %791 = vrot.lane.b32.xlu0 %v749, 112
    %v792 = vpop.permute.xlu0 %791
    %795 = vrot.lane.b32.xlu0 %v748, 104
    %v796 = vpop.permute.xlu0 %795
    %797 = vrot.lane.b32.xlu0 %v749, 104
    %v798 = vpop.permute.xlu0 %797
    %v801 = vpack.c.bf16 %v749, %v748
    %v802 = vpack.c.bf16 %v786, %v784
    %v803 = vpack.c.bf16 %v792, %v790
    %v804 = vpack.c.bf16 %v798, %v796
    %807 = vrot.lane.b32.xlu0 %v755, 120
    %v808 = vpop.permute.xlu0 %807
    %809 = vrot.lane.b32.xlu0 %v756, 120
    %v810 = vpop.permute.xlu0 %809
    %813 = vrot.lane.b32.xlu0 %v755, 112
    %v814 = vpop.permute.xlu0 %813
    %815 = vrot.lane.b32.xlu0 %v756, 112
    %v816 = vpop.permute.xlu0 %815
    %819 = vrot.lane.b32.xlu0 %v755, 104
    %v820 = vpop.permute.xlu0 %819
    %821 = vrot.lane.b32.xlu0 %v756, 104
    %v822 = vpop.permute.xlu0 %821
    %v825 = vpack.c.bf16 %v756, %v755
    %v826 = vpack.c.bf16 %v810, %v808
    %v827 = vpack.c.bf16 %v816, %v814
    %v828 = vpack.c.bf16 %v822, %v820
    %833 = vrot.lane.b32.xlu0 %v801, 96
    %v834 = vpop.permute.xlu0 %833
    %835 = vrot.lane.b32.xlu0 %v802, 96
    %v836 = vpop.permute.xlu0 %835
    %837 = vrot.lane.b32.xlu0 %v803, 96
    %v838 = vpop.permute.xlu0 %837
    %839 = vrot.lane.b32.xlu0 %v804, 96
    %v840 = vpop.permute.xlu0 %839
    %v842 = vsel %vm201, %v777, 0
    %v845 = vsel %vm201, %v778, 0
    %v848 = vsel %vm201, %v779, 0
    %v851 = vsel %vm201, %v780, 0
    %v854 = vsel %vm201, %v834, 0
    %v857 = vsel %vm201, %v836, 0
    %v860 = vsel %vm201, %v838, 0
    %v863 = vsel %vm201, %v840, 0
    %865 = vmatpush.bf16.xpose.msra.mxu0 0
    %866 = vmatpush.bf16.xpose.msra.mxu0 0
    %867 = vmatpush.bf16.xpose.msra.mxu0 0
    %868 = vmatpush.bf16.xpose.msra.mxu0 0
    %869 = vmatpush.bf16.xpose.msra.mxu0 %v863
    %870 = vmatpush.bf16.xpose.msra.mxu0 %v860
    %871 = vmatpush.bf16.xpose.msra.mxu0 %v857
    %872 = vmatpush.bf16.xpose.msra.mxu0 %v854
    %873 = vmatmul.bf16.gmra.mxu0 %v842
    %v874 = vpop.f32.mrf.mxu0
    %v875 = vadd.f32 %v30, %v874
    %v876 = vpop.f32.mrf.mxu0
    %v877 = vadd.f32 %v31, %v876
    %878 = vmatmul.bf16.gmra.mxu0 %v845
    %v879 = vpop.f32.mrf.mxu0
    %v880 = vadd.f32 %v32, %v879
    %v881 = vpop.f32.mrf.mxu0
    %v882 = vadd.f32 %v33, %v881
    %883 = vmatmul.bf16.gmra.mxu0 %v848
    %v884 = vpop.f32.mrf.mxu0
    %v885 = vadd.f32 %v34, %v884
    %v886 = vpop.f32.mrf.mxu0
    %v887 = vadd.f32 %v35, %v886
    %888 = vmatmul.bf16.gmra.mxu0 %v851
    %v889 = vpop.f32.mrf.mxu0
    %v890 = vadd.f32 %v36, %v889
    %v891 = vpop.f32.mrf.mxu0
    %v892 = vadd.f32 %v37, %v891
    %893 = vdwg.mxu0
    %v894 = vsel %vm255, %v875, -inf
    %895 = vmax.xlane.f32.xlu0 %v894
    %v896 = vpop.xlane.xlu0 %895
    %v897 = vsel %vm255, %v877, -inf
    %898 = vmax.xlane.f32.xlu0 %v897
    %v899 = vpop.xlane.xlu0 %898
    %v900 = vsel %vm255, %v880, -inf
    %901 = vmax.xlane.f32.xlu0 %v900
    %v902 = vpop.xlane.xlu0 %901
    %v903 = vsel %vm255, %v882, -inf
    %904 = vmax.xlane.f32.xlu0 %v903
    %v905 = vpop.xlane.xlu0 %904
    %v906 = vsel %vm255, %v885, -inf
    %907 = vmax.xlane.f32.xlu0 %v906
    %v908 = vpop.xlane.xlu0 %907
    %v909 = vsel %vm255, %v887, -inf
    %910 = vmax.xlane.f32.xlu0 %v909
    %v911 = vpop.xlane.xlu0 %910
    %v912 = vsel %vm255, %v890, -inf
    %913 = vmax.xlane.f32.xlu0 %v912
    %v914 = vpop.xlane.xlu0 %913
    %v915 = vsel %vm255, %v892, -inf
    %916 = vmax.xlane.f32.xlu0 %v915
    %v917 = vpop.xlane.xlu0 %916
    %v918 = vsub.f32 %v875, %v896
    %v919 = vsub.f32 %v877, %v899
    %v920 = vsub.f32 %v880, %v902
    %v921 = vsub.f32 %v882, %v905
    %v922 = vsub.f32 %v885, %v908
    %v923 = vsub.f32 %v887, %v911
    %v924 = vsub.f32 %v890, %v914
    %v925 = vsub.f32 %v892, %v917
    %v926 = vmul.f32 %v918, 1.442695
    %v927 = vpow.pop %v926
    %v928 = vmul.f32 %v919, 1.442695
    %v929 = vpow.pop %v928
    %v930 = vmul.f32 %v920, 1.442695
    %v931 = vpow.pop %v930
    %v932 = vmul.f32 %v921, 1.442695
    %v933 = vpow.pop %v932
    %v934 = vmul.f32 %v922, 1.442695
    %v935 = vpow.pop %v934
    %v936 = vmul.f32 %v923, 1.442695
    %v937 = vpow.pop %v936
    %v938 = vmul.f32 %v924, 1.442695
    %v939 = vpow.pop %v938
    %v940 = vmul.f32 %v925, 1.442695
    %v941 = vpow.pop %v940
    %v942 = vsel %vm255, %v927, 0.0
    %943 = vadd.xlane.f32.xlu0 %v942
    %v944 = vpop.xlane.xlu0 %943
    %v945 = vsel %vm255, %v929, 0.0
    %946 = vadd.xlane.f32.xlu0 %v945
    %v947 = vpop.xlane.xlu0 %946
    %v948 = vsel %vm255, %v931, 0.0
    %949 = vadd.xlane.f32.xlu0 %v948
    %v950 = vpop.xlane.xlu0 %949
    %v951 = vsel %vm255, %v933, 0.0
    %952 = vadd.xlane.f32.xlu0 %v951
    %v953 = vpop.xlane.xlu0 %952
    %v954 = vsel %vm255, %v935, 0.0
    %955 = vadd.xlane.f32.xlu0 %v954
    %v956 = vpop.xlane.xlu0 %955
    %v957 = vsel %vm255, %v937, 0.0
    %958 = vadd.xlane.f32.xlu0 %v957
    %v959 = vpop.xlane.xlu0 %958
    %v960 = vsel %vm255, %v939, 0.0
    %961 = vadd.xlane.f32.xlu0 %v960
    %v962 = vpop.xlane.xlu0 %961
    %v963 = vsel %vm255, %v941, 0.0
    %964 = vadd.xlane.f32.xlu0 %v963
    %v965 = vpop.xlane.xlu0 %964
    %v966 = vrcp.pop %v944
    %v967 = vrcp.pop %v947
    %v968 = vrcp.pop %v950
    %v969 = vrcp.pop %v953
    %v970 = vrcp.pop %v956
    %v971 = vrcp.pop %v959
    %v972 = vrcp.pop %v962
    %v973 = vrcp.pop %v965
    %v974 = vmul.f32 %v927, %v966
    %v975 = vmul.f32 %v929, %v967
    %v976 = vmul.f32 %v931, %v968
    %v977 = vmul.f32 %v933, %v969
    %v978 = vmul.f32 %v935, %v970
    %v979 = vmul.f32 %v937, %v971
    %v980 = vmul.f32 %v939, %v972
    %v981 = vmul.f32 %v941, %v973
    %v982 = vpack.c.bf16 %v975, %v974
    %v983 = vpack.c.bf16 %v977, %v976
    %v984 = vpack.c.bf16 %v979, %v978
    %v985 = vpack.c.bf16 %v981, %v980
    %990 = vrot.lane.b32.xlu0 %v825, 64
    %v991 = vpop.permute.xlu0 %990
    %992 = vrot.lane.b32.xlu0 %v826, 64
    %v993 = vpop.permute.xlu0 %992
    %994 = vrot.lane.b32.xlu0 %v827, 64
    %v995 = vpop.permute.xlu0 %994
    %996 = vrot.lane.b32.xlu0 %v828, 64
    %v997 = vpop.permute.xlu0 %996
    %v1003 = vsel %vm255, %v982, 0
    %v1006 = vsel %vm255, %v983, 0
    %v1009 = vsel %vm255, %v984, 0
    %v1012 = vsel %vm255, %v985, 0
    %1014 = vmatpush.bf16.msra.mxu0 0
    %1015 = vmatpush.bf16.msra.mxu0 0
    %1016 = vmatpush.bf16.msra.mxu0 0
    %1017 = vmatpush.bf16.msra.mxu0 0
    %1018 = vmatpush.bf16.msra.mxu0 %v997
    %1019 = vmatpush.bf16.msra.mxu0 %v995
    %1020 = vmatpush.bf16.msra.mxu0 %v993
    %1021 = vmatpush.bf16.msra.mxu0 %v991
    %1022 = vmatmul.bf16.gmra.mxu0 %v1003
    %v1023 = vpop.f32.mrf.mxu0
    %v1024 = vadd.f32 0.0, %v1023
    %v1025 = vpop.f32.mrf.mxu0
    %v1026 = vadd.f32 0.0, %v1025
    %1027 = vmatmul.bf16.gmra.mxu0 %v1006
    %v1028 = vpop.f32.mrf.mxu0
    %v1029 = vadd.f32 0.0, %v1028
    %v1030 = vpop.f32.mrf.mxu0
    %v1031 = vadd.f32 0.0, %v1030
    %1032 = vmatmul.bf16.gmra.mxu0 %v1009
    %v1033 = vpop.f32.mrf.mxu0
    %v1034 = vadd.f32 0.0, %v1033
    %v1035 = vpop.f32.mrf.mxu0
    %v1036 = vadd.f32 0.0, %v1035
    %1037 = vmatmul.bf16.gmra.mxu0 %v1012
    %v1038 = vpop.f32.mrf.mxu0
    %v1039 = vadd.f32 0.0, %v1038
    %v1040 = vpop.f32.mrf.mxu0
    %v1041 = vadd.f32 0.0, %v1040
    %1042 = vdwg.mxu0
    %1045 = vrot.lane.b32.xlu0 %v1029, 8
    %v1046 = vpop.permute.xlu0 %1045
    %1047 = vrot.lane.b32.xlu0 %v1031, 8
    %v1048 = vpop.permute.xlu0 %1047
    %1053 = vrot.lane.b32.xlu0 %v1034, 16
    %v1054 = vpop.permute.xlu0 %1053
    %1055 = vrot.lane.b32.xlu0 %v1036, 16
    %v1056 = vpop.permute.xlu0 %1055
    %1061 = vrot.lane.b32.xlu0 %v1039, 24
    %v1062 = vpop.permute.xlu0 %1061
    %1063 = vrot.lane.b32.xlu0 %v1041, 24
    %v1064 = vpop.permute.xlu0 %1063
    %v1067 = vsel %vm201, %v1024, %v1046
    %v1068 = vsel %vm201, %v1026, %v1048
    %v1069 = vsel %vm431, %v1067, %v1054
    %v1070 = vsel %vm431, %v1068, %v1056
    %v1071 = vsel %vm434, %v1069, %v1062
    %v1072 = vsel %vm434, %v1070, %v1064
    %v1073 = vpack.c.bf16 %v1072, %v1071
    %v1074 = vperm.slane %v708, 3
    %v1079 = vunpack.c.l.b16 %v682
    %v1080 = vunpack.c.l.b16 %v683
    %v1081 = vunpack.c.l.b16 %v684
    %v1082 = vunpack.c.l.b16 %v685
    %v1083 = vpack.c.b16 %v1080, %v1079
    %v1084 = vpack.c.b16 %v1082, %v1081
    %v1088 = vsel %vm82, %v1073, 0
    %1090 = vmatpush.bf16.msra.mxu0 0
    %1091 = vmatpush.bf16.msra.mxu0 0
    %1092 = vmatpush.bf16.msra.mxu0 0
    %1093 = vmatpush.bf16.msra.mxu0 0
    %1094 = vmatpush.bf16.msra.mxu0 0
    %1095 = vmatpush.bf16.msra.mxu0 0
    %1096 = vmatpush.bf16.msra.mxu0 %v1084
    %1097 = vmatpush.bf16.msra.mxu0 %v1083
    %1098 = vmatmul.bf16.gmra.mxu0 %v1088
    %v1099 = vpop.f32.mrf.mxu0
    %v1100 = vadd.f32 %v1074, %v1099
    %v1101 = vpop.f32.mrf.mxu0
    %v1102 = vadd.f32 %v1074, %v1101
    %1103 = vdwg.mxu0
    %v1104 = vadd.f32 %v674, %v1100
    %v1105 = vadd.f32 %v675, %v1102
    %v1106 = vsel %vm82, %v1104, 0.0
    %1107 = vadd.xlane.f32.xlu0 %v1106
    %v1108 = vpop.xlane.xlu0 %1107
    %v1109 = vsel %vm82, %v1105, 0.0
    %1110 = vadd.xlane.f32.xlu0 %v1109
    %v1111 = vpop.xlane.xlu0 %1110
    %v1112 = vmul.f32 %v1108, %v482
    %v1113 = vmul.f32 %v1111, %v482
    %v1114 = vsub.f32 %v1104, %v1112
    %v1115 = vsub.f32 %v1105, %v1113
    %v1116 = vmul.f32 %v1114, %v1114
    %v1117 = vmul.f32 %v1115, %v1115
    %v1118 = vsel %vm82, %v1116, 0.0
    %1119 = vadd.xlane.f32.xlu0 %v1118
    %v1120 = vpop.xlane.xlu0 %1119
    %v1121 = vsel %vm82, %v1117, 0.0
    %1122 = vadd.xlane.f32.xlu0 %v1121
    %v1123 = vpop.xlane.xlu0 %1122
    %v1124 = vmul.f32 %v1120, %v482
    %v1125 = vmul.f32 %v1123, %v482
    %v1126 = vadd.f32 %v1124, 1e-05
    %v1127 = vadd.f32 %v1125, 1e-05
    %v1128 = vrsqrt.pop %v1126
    %v1129 = vmul.f32 %v1128, %v1126
    %v1130 = vmul.f32 %v1129, %v1128
    %v1131 = vmul.f32 0.5, %v1130
    %v1132 = vsub.f32 1.5, %v1131
    %v1133 = vmul.f32 %v1128, %v1132
    %vm1134 = vweird.f32 %v1126
    %vm1135 = vweird.f32 %v1128
    %vm1136 = vmor %vm1134, %vm1135
    %v1137 = vsel %vm1136, %v1128, %v1133
    %v1138 = vrsqrt.pop %v1127
    %v1139 = vmul.f32 %v1138, %v1127
    %v1140 = vmul.f32 %v1139, %v1138
    %v1141 = vmul.f32 0.5, %v1140
    %v1142 = vsub.f32 1.5, %v1141
    %v1143 = vmul.f32 %v1138, %v1142
    %vm1144 = vweird.f32 %v1127
    %vm1145 = vweird.f32 %v1138
    %vm1146 = vmor %vm1144, %vm1145
    %v1147 = vsel %vm1146, %v1138, %v1143
    %v1148 = vmul.f32 %v1114, %v1137
    %v1149 = vmul.f32 %v1115, %v1147
    %v1150 = vperm.slane %v708, 4
    %v1151 = vmul.f32 %v1148, %v1150
    %v1152 = vmul.f32 %v1149, %v1150
    %v1153 = vperm.slane %v708, 5
    %v1154 = vadd.f32 %v1151, %v1153
    %v1155 = vadd.f32 %v1152, %v1153
    %v1156 = vpack.c.bf16 %v1155, %v1154
    %v1157 = vperm.slane %v38, 1
    %v1162 = vunpack.c.l.b16 %v703
    %v1163 = vunpack.c.l.b16 %v704
    %v1164 = vunpack.c.l.b16 %v705
    %v1165 = vunpack.c.l.b16 %v706
    %v1166 = vpack.c.b16 %v1163, %v1162
    %v1167 = vpack.c.b16 %v1165, %v1164
    %v1171 = vsel %vm82, %v1156, 0
    %1173 = vmatpush.bf16.msra.mxu0 0
    %1174 = vmatpush.bf16.msra.mxu0 0
    %1175 = vmatpush.bf16.msra.mxu0 0
    %1176 = vmatpush.bf16.msra.mxu0 0
    %1177 = vmatpush.bf16.msra.mxu0 0
    %1178 = vmatpush.bf16.msra.mxu0 0
    %1179 = vmatpush.bf16.msra.mxu0 %v1167
    %1180 = vmatpush.bf16.msra.mxu0 %v1166
    %1181 = vmatmul.bf16.gmra.mxu0 %v1171
    %v1182 = vpop.f32.mrf.mxu0
    %v1183 = vadd.f32 %v1157, %v1182
    %v1184 = vpop.f32.mrf.mxu0
    %v1185 = vadd.f32 %v1157, %v1184
    %1186 = vdwg.mxu0
    %v1187 = vmax.f32 %v1183, 0.0
    %v1188 = vmax.f32 %v1185, 0.0
    %v1189 = vpack.c.bf16 %v1188, %v1187
    %v1190 = vperm.slane %v708, 6
    %v1207 = vunpack.c.l.b16 %v686
    %v1208 = vunpack.c.l.b16 %v687
    %v1209 = vunpack.c.l.b16 %v688
    %v1210 = vunpack.c.l.b16 %v689
    %v1211 = vunpack.c.l.b16 %v690
    %v1212 = vunpack.c.l.b16 %v691
    %v1213 = vunpack.c.l.b16 %v692
    %v1214 = vunpack.c.l.b16 %v693
    %v1215 = vunpack.c.l.b16 %v694
    %v1216 = vunpack.c.l.b16 %v695
    %v1217 = vunpack.c.l.b16 %v696
    %v1218 = vunpack.c.l.b16 %v697
    %v1219 = vunpack.c.l.b16 %v698
    %v1220 = vunpack.c.l.b16 %v699
    %v1221 = vunpack.c.l.b16 %v700
    %v1222 = vunpack.c.l.b16 %v701
    %v1223 = vpack.c.b16 %v1208, %v1207
    %v1224 = vpack.c.b16 %v1210, %v1209
    %v1225 = vpack.c.b16 %v1212, %v1211
    %v1226 = vpack.c.b16 %v1214, %v1213
    %v1227 = vpack.c.b16 %v1216, %v1215
    %v1228 = vpack.c.b16 %v1218, %v1217
    %v1229 = vpack.c.b16 %v1220, %v1219
    %v1230 = vpack.c.b16 %v1222, %v1221
    %1239 = vmatpush.bf16.msra.mxu0 %v1230
    %1240 = vmatpush.bf16.msra.mxu0 %v1229
    %1241 = vmatpush.bf16.msra.mxu0 %v1228
    %1242 = vmatpush.bf16.msra.mxu0 %v1227
    %1243 = vmatpush.bf16.msra.mxu0 %v1226
    %1244 = vmatpush.bf16.msra.mxu0 %v1225
    %1245 = vmatpush.bf16.msra.mxu0 %v1224
    %1246 = vmatpush.bf16.msra.mxu0 %v1223
    %1247 = vmatmul.bf16.gmra.mxu0 %v1189
    %v1248 = vpop.f32.mrf.mxu0
    %v1249 = vadd.f32 %v1190, %v1248
    %v1250 = vpop.f32.mrf.mxu0
    %v1251 = vadd.f32 %v1190, %v1250
    %1252 = vdwg.mxu0
    %v1253 = vadd.f32 %v1154, %v1249
    %v1254 = vadd.f32 %v1155, %v1251
    %v1255 = vsel %vm82, %v1253, 0.0
    %1256 = vadd.xlane.f32.xlu0 %v1255
    %v1257 = vpop.xlane.xlu0 %1256
    %v1258 = vsel %vm82, %v1254, 0.0
    %1259 = vadd.xlane.f32.xlu0 %v1258
    %v1260 = vpop.xlane.xlu0 %1259
    %v1261 = vmul.f32 %v1257, %v482
    %v1262 = vmul.f32 %v1260, %v482
    %v1263 = vsub.f32 %v1253, %v1261
    %v1264 = vsub.f32 %v1254, %v1262
    %v1265 = vmul.f32 %v1263, %v1263
    %v1266 = vmul.f32 %v1264, %v1264
    %v1267 = vsel %vm82, %v1265, 0.0
    %1268 = vadd.xlane.f32.xlu0 %v1267
    %v1269 = vpop.xlane.xlu0 %1268
    %v1270 = vsel %vm82, %v1266, 0.0
    %1271 = vadd.xlane.f32.xlu0 %v1270
    %v1272 = vpop.xlane.xlu0 %1271
    %v1273 = vmul.f32 %v1269, %v482
    %v1274 = vmul.f32 %v1272, %v482
    %v1275 = vadd.f32 %v1273, 1e-05
    %v1276 = vadd.f32 %v1274, 1e-05
    %v1277 = vrsqrt.pop %v1275
    %v1278 = vmul.f32 %v1277, %v1275
    %v1279 = vmul.f32 %v1278, %v1277
    %v1280 = vmul.f32 0.5, %v1279
    %v1281 = vsub.f32 1.5, %v1280
    %v1282 = vmul.f32 %v1277, %v1281
    %vm1283 = vweird.f32 %v1275
    %vm1284 = vweird.f32 %v1277
    %vm1285 = vmor %vm1283, %vm1284
    %v1286 = vsel %vm1285, %v1277, %v1282
    %v1287 = vrsqrt.pop %v1276
    %v1288 = vmul.f32 %v1287, %v1276
    %v1289 = vmul.f32 %v1288, %v1287
    %v1290 = vmul.f32 0.5, %v1289
    %v1291 = vsub.f32 1.5, %v1290
    %v1292 = vmul.f32 %v1287, %v1291
    %vm1293 = vweird.f32 %v1276
    %vm1294 = vweird.f32 %v1287
    %vm1295 = vmor %vm1293, %vm1294
    %v1296 = vsel %vm1295, %v1287, %v1292
    %v1297 = vmul.f32 %v1263, %v1286
    %v1298 = vmul.f32 %v1264, %v1296
    %v1299 = vperm.slane %v708, 7
    %v1300 = vmul.f32 %v1297, %v1299
    %v1301 = vmul.f32 %v1298, %v1299
    %v1302 = vperm.slane %v709, 0
    %v1303 = vadd.f32 %v1300, %v1302
    %v1304 = vadd.f32 %v1301, %v1302
    %s1305 = scalar_lea.vmem %s4, 32
    %v1306 = vld [vmem:[%s1305] sm:$0xf]
    %v1307 = vld [vmem:[%s1305 + $0x4] sm:$0xf]
    %v1308 = vld [vmem:[%s1305 + $0x8] sm:$0xf]
    %v1309 = vld [vmem:[%s1305 + $0xc] sm:$0xf]
    %v1310 = vpack.c.bf16 %v1304, %v1303
    %v1311 = vperm.slane %v38, 2
    %v1316 = vunpack.c.l.b16 %v1306
    %v1317 = vunpack.c.l.b16 %v1307
    %v1318 = vunpack.c.l.b16 %v1308
    %v1319 = vunpack.c.l.b16 %v1309
    %v1320 = vpack.c.b16 %v1317, %v1316
    %v1321 = vpack.c.b16 %v1319, %v1318
    %v1325 = vsel %vm82, %v1310, 0
    %1327 = vmatpush.bf16.msra.mxu0 0
    %1328 = vmatpush.bf16.msra.mxu0 0
    %1329 = vmatpush.bf16.msra.mxu0 0
    %1330 = vmatpush.bf16.msra.mxu0 0
    %1331 = vmatpush.bf16.msra.mxu0 0
    %1332 = vmatpush.bf16.msra.mxu0 0
    %1333 = vmatpush.bf16.msra.mxu0 %v1321
    %1334 = vmatpush.bf16.msra.mxu0 %v1320
    %1335 = vmatmul.bf16.gmra.mxu0 %v1325
    %v1336 = vpop.f32.mrf.mxu0
    %v1337 = vadd.f32 %v1311, %v1336
    %v1338 = vpop.f32.mrf.mxu0
    %v1339 = vadd.f32 %v1311, %v1338
    %1340 = vdwg.mxu0
    %1341 = vst [vmem:[#allocation2] sm:$0xff] %v1337
    %1342 = vst [vmem:[#allocation2 + $0x8] sm:$0xff] %v1339
    // Predicated region
    $region30: #{tpu_custom_call.1} parent=1 // pred_check
      _
    $region31: #{tpu_custom_call.1} parent=1 // pred_check_branch
      %1344 = sbr.rel (0) target = $region33
    $region32: #{tpu_custom_call.1} parent=1 // pred_region
      %1346 = vsyncadd [#allocation3], 0
      %s1347 = sshll.u32 [#allocation2], 4
      %s1348 = int_to_ptr.vmem [resolvable:$true] %s1347
      %s1349 = sshll.u32 %s7, 4
      %s1350 = int_to_ptr.hbm [resolvable:$true] %s1349
      %1355 = dma.vmem_to_hbm [thread:$0]  %s1348, 256, %s1350, [#allocation3], 128, 128, 8
    $region33: #{tpu_custom_call.1} parent=1 // pred_fallthru
      _
    // Predicated region
    $region34: #{tpu_custom_call.1} parent=1 // pred_check
      _
    $region35: #{tpu_custom_call.1} parent=1 // pred_check_branch
      %1357 = sbr.rel (0) target = $region37
    $region36: #{tpu_custom_call.1} parent=1 // pred_region
      %1359 = dma.done [#allocation3], 256
    $region37: #{tpu_custom_call.1} parent=1 // pred_fallthru
      _
    %1360 = vsyncpa [#allocation3], 1

</llo_original>
